<compile_context>
chip_gen: v6e
topology: v6e:2x2x1
jax: 0.10.0
libtpu: 0.0.40
codegen_flags: <defaults>
</compile_context>

<pallas_src>
import functools

import jax
import jax.numpy as jnp
from jax.experimental import pallas as pl
from jax.experimental.pallas import tpu as pltpu

LATENT_DIM = 2
IN_DIM = 28 * 28          # 784
IN_PAD = 7 * 128          # 896: lane-dense input width (x / w1 K-dim zero-padded)
OUT_PAD = 7 * 128         # 896: lane-dense recon width (sliced to 784 after)
HEAD_PAD = 128            # lane-dense packed [mu | logvar | zeros] width
H1 = 256
H2 = 128
ALIGN = 16                # bf16 sublane packing (16,128) -> 16-row batch alignment


def _round_up(n, m):
    return ((n + m - 1) // m) * m


def _choose_tiling(B):
    """Pick (TB, B_pad): 16-row aligned batch tile, <=256 rows, >=2 grid steps when
    possible (v7x megacore), batch-padding waste capped at ~25%."""
    B16 = _round_up(max(B, 1), ALIGN)
    if B16 <= ALIGN:
        return ALIGN, ALIGN
    best_tb, best_pad = ALIGN, B16
    for tb in (32, 64, 128, 256):
        b_pad = _round_up(B16, tb)
        if b_pad < 2 * tb:                 # would collapse to a single grid step
            continue
        if 4 * (b_pad - B16) > b_pad:      # cap pure-padding rows at 25%
            continue
        best_tb, best_pad = tb, b_pad
    return best_tb, best_pad


def _vae_kernel(
    x_ref, eps_ref,
    w1_ref, b1_ref, w2_ref, b2_ref,
    whead_ref, bhead_ref,
    wd1_ref, bd1_ref, wd2_ref, bd2_ref, wd3_ref, bd3_ref,
    recon_ref, mulv_ref,
    *, latent_dim,
):
    x = x_ref[...]  # (TB, 896) bf16 (K zero-padded 784->896)

    # ---- encoder (bf16 MXU operands, f32 accumulate, f32 VPU epilogue) ----
    h = jnp.dot(x, w1_ref[...], preferred_element_type=jnp.float32) + b1_ref[...]
    h = jnp.maximum(h, 0.0)                                   # ReLU
    h = jnp.dot(h.astype(jnp.bfloat16), w2_ref[...],
                preferred_element_type=jnp.float32) + b2_ref[...]
    h = jnp.maximum(h, 0.0)                                   # ReLU

    # ---- fused, lane-dense mu/logvar head: one (H2, 128) matmul ----
    head = jnp.dot(h.astype(jnp.bfloat16), whead_ref[...],
                   preferred_element_type=jnp.float32) + bhead_ref[...]
    mu = head[:, :latent_dim]
    logvar = head[:, latent_dim:2 * latent_dim]

    # ---- reparameterize: z = mu + exp(0.5*logvar) * eps (f32, EUP exp) ----
    z = mu + jnp.exp(0.5 * logvar) * eps_ref[...]

    # ---- decoder layer 1 as VPU broadcast-MACs (K = latent_dim is degenerate on MXU) ----
    wd1 = wd1_ref[...]                                        # (latent, H2) f32
    d = bd1_ref[...]                                          # (1, H2) broadcasts to (TB, H2)
    for k in range(latent_dim):
        d = d + z[:, k:k + 1] * wd1[k:k + 1, :]
    d = jnp.maximum(d, 0.0)                                   # ReLU

    # ---- decoder layers 2 & 3 (lane-dense, zero-padded to 896 output cols) ----
    d = jnp.dot(d.astype(jnp.bfloat16), wd2_ref[...],
                preferred_element_type=jnp.float32) + bd2_ref[...]
    d = jnp.maximum(d, 0.0)                                   # ReLU
    d = jnp.dot(d.astype(jnp.bfloat16), wd3_ref[...],
                preferred_element_type=jnp.float32) + bd3_ref[...]

    # TODO(synk): restrict sigmoid to the live 784 lanes if EUP becomes the binding slot.
    recon_ref[...] = jax.nn.sigmoid(d)                        # Sigmoid (full unmasked store)
    mulv_ref[...] = head                                      # lane-dense packed [mu|logvar|0]


def prepare_params(params, latent_dim=LATENT_DIM):
    """One-time weight preprocessing (hoisted out of the per-call forward)."""
    w1, b1, w2, b2, wmu, bmu, wlv, blv, wd1, bd1, wd2, bd2, wd3, bd3 = params
    f32, bf16 = jnp.float32, jnp.bfloat16

    # Pad w1's K dim 784 -> 896 (matches lane-padded x), cast MXU operands to bf16.
    w1p = jnp.pad(w1, ((0, IN_PAD - IN_DIM), (0, 0))).astype(bf16)         # (896, 256)

    # Fused, lane-dense [mu | logvar | zeros] head: (H2, 128).
    whead = jnp.zeros((H2, HEAD_PAD), f32)
    whead = whead.at[:, :latent_dim].set(wmu).at[:, latent_dim:2 * latent_dim].set(wlv)
    bhead = jnp.zeros((1, HEAD_PAD), f32)
    bhead = bhead.at[:, :latent_dim].set(bmu).at[:, latent_dim:2 * latent_dim].set(blv)

    # Decoder output padded to 896 lanes so every recon store is a full vst.
    wd3p = jnp.pad(wd3, ((0, 0), (0, OUT_PAD - IN_DIM))).astype(bf16)      # (256, 896)
    bd3p = jnp.pad(bd3, ((0, 0), (0, OUT_PAD - IN_DIM))).astype(f32)       # (1, 896)

    return (
        w1p, b1.astype(f32),
        w2.astype(bf16), b2.astype(f32),
        whead.astype(bf16), bhead,
        wd1.astype(f32), bd1.astype(f32),       # tiny K=latent layer stays on the VPU in f32
        wd2.astype(bf16), bd2.astype(f32),
        wd3p, bd3p,
    )


@functools.partial(jax.jit, static_argnames=("latent_dim",))
def vae_forward(x, eps, prepared, latent_dim=LATENT_DIM):
    """x: (B, 1, 28, 28) float32, eps: (B, latent_dim) float32, prepared: prepare_params(...)."""
    B = x.shape[0]
    TB, B_pad = _choose_tiling(B)
    pad_rows = B_pad - B

    x_flat = x.reshape(B, IN_DIM)                                  # nn.Flatten (free reshape)
    # One fused pad(+rows, +lanes) + bf16 cast; kernel sees lane-dense bf16 x.
    x_in = jnp.pad(x_flat, ((0, pad_rows), (0, IN_PAD - IN_DIM))).astype(jnp.bfloat16)
    eps_in = eps if pad_rows == 0 else jnp.pad(eps, ((0, pad_rows), (0, 0)))

    grid = (B_pad // TB,)
    rows = lambda i: (i, 0)      # batch-tiled operands
    fixed = lambda i: (0, 0)     # VMEM-resident weights/biases

    in_specs = [
        pl.BlockSpec((TB, IN_PAD), rows),        # x tile (bf16)
        pl.BlockSpec((TB, latent_dim), rows),    # eps tile (f32)
    ] + [pl.BlockSpec(w.shape, fixed) for w in prepared]

    out_shapes = (
        jax.ShapeDtypeStruct((B_pad, OUT_PAD), jnp.float32),       # recon (lane-padded)
        jax.ShapeDtypeStruct((B_pad, HEAD_PAD), jnp.float32),      # packed [mu|logvar|0]
    )
    out_specs = (
        pl.BlockSpec((TB, OUT_PAD), rows),
        pl.BlockSpec((TB, HEAD_PAD), rows),
    )

    recon_pad, mulv = pl.pallas_call(
        functools.partial(_vae_kernel, latent_dim=latent_dim),
        out_shape=out_shapes,
        grid=grid,
        in_specs=in_specs,
        out_specs=out_specs,
        compiler_params=pltpu.CompilerParams(
            dimension_semantics=("parallel",),
            vmem_limit_bytes=32 << 20,
        ),
    )(x_in, eps_in, *prepared)

    recon = recon_pad[:B, :IN_DIM].reshape(B, 1, 28, 28)           # .view(-1, 1, 28, 28)
    mu = mulv[:B, :latent_dim]
    logvar = mulv[:B, latent_dim:2 * latent_dim]
    return recon, mu, logvar


def init_params(key, latent_dim=LATENT_DIM):
    """Deterministic init mimicking PyTorch Linear default (U[-1/sqrt(fan_in), 1/sqrt(fan_in)]).
    Weights stored as (in_features, out_features); biases as (1, out_features)."""
    def linear(key, fan_in, fan_out):
        kw, kb = jax.random.split(key)
        bound = 1.0 / (fan_in ** 0.5)
        w = jax.random.uniform(kw, (fan_in, fan_out), jnp.float32, -bound, bound)
        b = jax.random.uniform(kb, (1, fan_out), jnp.float32, -bound, bound)
        return w, b

    keys = jax.random.split(key, 8)
    w1, b1 = linear(keys[0], IN_DIM, H1)          # encoder Linear(784, 256)
    w2, b2 = linear(keys[1], H1, H2)              # encoder Linear(256, 128)
    wmu, bmu = linear(keys[2], H2, latent_dim)    # fc_mu
    wlv, blv = linear(keys[3], H2, latent_dim)    # fc_logvar
    wd1, bd1 = linear(keys[4], latent_dim, H2)    # decoder Linear(2, 128)
    wd2, bd2 = linear(keys[5], H2, H1)            # decoder Linear(128, 256)
    wd3, bd3 = linear(keys[6], H1, IN_DIM)        # decoder Linear(256, 784)
    return (w1, b1, w2, b2, wmu, bmu, wlv, blv, wd1, bd1, wd2, bd2, wd3, bd3)


def _reference(x, eps, params):
    """Pure-JAX f32 reference of the PyTorch forward."""
    w1, b1, w2, b2, wmu, bmu, wlv, blv, wd1, bd1, wd2, bd2, wd3, bd3 = params
    B = x.shape[0]
    xf = x.reshape(B, IN_DIM)
    h = jnp.maximum(xf @ w1 + b1, 0.0)
    h = jnp.maximum(h @ w2 + b2, 0.0)
    mu = h @ wmu + bmu
    lv = h @ wlv + blv
    z = mu + jnp.exp(0.5 * lv) * eps
    d = jnp.maximum(z @ wd1 + bd1, 0.0)
    d = jnp.maximum(d @ wd2 + bd2, 0.0)
    recon = jax.nn.sigmoid(d @ wd3 + bd3).reshape(B, 1, 28, 28)
    return recon, mu, lv


if __name__ == "__main__":
    key = jax.random.PRNGKey(0)
    k_params, k_x, k_eps = jax.random.split(key, 3)

    B = 4
    params = init_params(k_params, LATENT_DIM)
    prepared = prepare_params(params, LATENT_DIM)     # one-time weight prep (hoisted)
    x = jax.random.uniform(k_x, (B, 1, 28, 28), jnp.float32)        # MNIST-like input
    eps = jax.random.normal(k_eps, (B, LATENT_DIM), jnp.float32)    # reparameterization noise

    recon, mu, logvar = vae_forward(x, eps, prepared)
    jax.block_until_ready((recon, mu, logvar))

    assert recon.shape == (B, 1, 28, 28)
    assert mu.shape == (B, LATENT_DIM)
    assert logvar.shape == (B, LATENT_DIM)

    # correctness check vs. pure-JAX f32 reference (tolerance loosened for bf16 MXU operands)
    recon_r, mu_r, lv_r = _reference(x, eps, params)
    assert jnp.allclose(recon, recon_r, atol=2e-2), float(jnp.max(jnp.abs(recon - recon_r)))
    assert jnp.allclose(mu, mu_r, atol=2e-2), float(jnp.max(jnp.abs(mu - mu_r)))
    assert jnp.allclose(logvar, lv_r, atol=2e-2), float(jnp.max(jnp.abs(logvar - lv_r)))

    # also exercise a batch that spans multiple grid tiles (non-multiple of the tile size)
    B2 = 20
    x2 = jax.random.uniform(jax.random.PRNGKey(1), (B2, 1, 28, 28), jnp.float32)
    eps2 = jax.random.normal(jax.random.PRNGKey(2), (B2, LATENT_DIM), jnp.float32)
    recon2, mu2, lv2 = vae_forward(x2, eps2, prepared)
    jax.block_until_ready((recon2, mu2, lv2))
    assert recon2.shape == (B2, 1, 28, 28)
    recon2_r, mu2_r, lv2_r = _reference(x2, eps2, params)
    assert jnp.allclose(recon2, recon2_r, atol=2e-2)
    assert jnp.allclose(mu2, mu2_r, atol=2e-2)
    assert jnp.allclose(lv2, lv2_r, atol=2e-2)

    print("KERNEL_OK")
</pallas_src>

<mosaic_0001>
module attributes {stable_mosaic.version = 11 : i64} {
  func.func @_vae_kernel(%arg0: i32, %arg1: memref<16x896xbf16, #tpu.memory_space<vmem>>, %arg2: memref<16x2xf32, #tpu.memory_space<vmem>>, %arg3: memref<896x256xbf16, #tpu.memory_space<vmem>>, %arg4: memref<1x256xf32, #tpu.memory_space<vmem>>, %arg5: memref<256x128xbf16, #tpu.memory_space<vmem>>, %arg6: memref<1x128xf32, #tpu.memory_space<vmem>>, %arg7: memref<128x128xbf16, #tpu.memory_space<vmem>>, %arg8: memref<1x128xf32, #tpu.memory_space<vmem>>, %arg9: memref<2x128xf32, #tpu.memory_space<vmem>>, %arg10: memref<1x128xf32, #tpu.memory_space<vmem>>, %arg11: memref<128x256xbf16, #tpu.memory_space<vmem>>, %arg12: memref<1x256xf32, #tpu.memory_space<vmem>>, %arg13: memref<256x896xbf16, #tpu.memory_space<vmem>>, %arg14: memref<1x896xf32, #tpu.memory_space<vmem>>, %arg15: memref<16x896xf32, #tpu.memory_space<vmem>>, %arg16: memref<16x128xf32, #tpu.memory_space<vmem>>) attributes {dimension_semantics = [#tpu.dimension_semantics<parallel>], iteration_bounds = array<i64: 1>, scalar_prefetch = 0 : i64, scratch_operands = 0 : i64, tpu.core_type = #tpu.core_type<tc>, window_params = [{transform_indices = @transform_0, window_bounds = array<i64: 16, 896>}, {transform_indices = @transform_1, window_bounds = array<i64: 16, 2>}, {pipeline_mode = #tpu.pipeline_mode<synchronous>, transform_indices = @transform_2, window_bounds = array<i64: 896, 256>}, {pipeline_mode = #tpu.pipeline_mode<synchronous>, transform_indices = @transform_3, window_bounds = array<i64: 1, 256>}, {pipeline_mode = #tpu.pipeline_mode<synchronous>, transform_indices = @transform_4, window_bounds = array<i64: 256, 128>}, {pipeline_mode = #tpu.pipeline_mode<synchronous>, transform_indices = @transform_5, window_bounds = array<i64: 1, 128>}, {pipeline_mode = #tpu.pipeline_mode<synchronous>, transform_indices = @transform_6, window_bounds = array<i64: 128, 128>}, {pipeline_mode = #tpu.pipeline_mode<synchronous>, transform_indices = @transform_7, window_bounds = array<i64: 1, 128>}, {pipeline_mode = #tpu.pipeline_mode<synchronous>, transform_indices = @transform_8, window_bounds = array<i64: 2, 128>}, {pipeline_mode = #tpu.pipeline_mode<synchronous>, transform_indices = @transform_9, window_bounds = array<i64: 1, 128>}, {pipeline_mode = #tpu.pipeline_mode<synchronous>, transform_indices = @transform_10, window_bounds = array<i64: 128, 256>}, {pipeline_mode = #tpu.pipeline_mode<synchronous>, transform_indices = @transform_11, window_bounds = array<i64: 1, 256>}, {pipeline_mode = #tpu.pipeline_mode<synchronous>, transform_indices = @transform_12, window_bounds = array<i64: 256, 896>}, {pipeline_mode = #tpu.pipeline_mode<synchronous>, transform_indices = @transform_13, window_bounds = array<i64: 1, 896>}, {transform_indices = @transform_14, window_bounds = array<i64: 16, 896>}, {transform_indices = @transform_15, window_bounds = array<i64: 16, 128>}]} {
    %c0 = arith.constant 0 : index
    %c0_0 = arith.constant 0 : index
    %0 = vector.load %arg1[%c0, %c0_0] : memref<16x896xbf16, #tpu.memory_space<vmem>>, vector<16x896xbf16>
    %c0_1 = arith.constant 0 : index
    %c0_2 = arith.constant 0 : index
    %1 = vector.load %arg3[%c0_1, %c0_2] : memref<896x256xbf16, #tpu.memory_space<vmem>>, vector<896x256xbf16>
    %cst = arith.constant dense<0.000000e+00> : vector<16x256xf32>
    %2 = tpu.matmul %0, %1, %cst {dimension_numbers = #tpu.dot_dimension_numbers<[1], [0], [0], [1], [0, 0, 1, 1], [], []>} : vector<16x896xbf16>, vector<896x256xbf16>, vector<16x256xf32> -> vector<16x256xf32>
    %c0_3 = arith.constant 0 : index
    %c0_4 = arith.constant 0 : index
    %3 = vector.load %arg4[%c0_3, %c0_4] : memref<1x256xf32, #tpu.memory_space<vmem>>, vector<1x256xf32>
    %4 = vector.broadcast %3 : vector<1x256xf32> to vector<16x256xf32>
    %5 = arith.addf %2, %4 : vector<16x256xf32>
    %cst_5 = arith.constant 0.000000e+00 : f32
    %6 = vector.broadcast %cst_5 : f32 to vector<16x256xf32>
    %7 = arith.maximumf %5, %6 : vector<16x256xf32>
    %8 = arith.truncf %7 : vector<16x256xf32> to vector<16x256xbf16>
    %c0_6 = arith.constant 0 : index
    %c0_7 = arith.constant 0 : index
    %9 = vector.load %arg5[%c0_6, %c0_7] : memref<256x128xbf16, #tpu.memory_space<vmem>>, vector<256x128xbf16>
    %cst_8 = arith.constant dense<0.000000e+00> : vector<16x128xf32>
    %10 = tpu.matmul %8, %9, %cst_8 {dimension_numbers = #tpu.dot_dimension_numbers<[1], [0], [0], [1], [0, 0, 1, 1], [], []>} : vector<16x256xbf16>, vector<256x128xbf16>, vector<16x128xf32> -> vector<16x128xf32>
    %c0_9 = arith.constant 0 : index
    %c0_10 = arith.constant 0 : index
    %11 = vector.load %arg6[%c0_9, %c0_10] : memref<1x128xf32, #tpu.memory_space<vmem>>, vector<1x128xf32>
    %12 = vector.broadcast %11 : vector<1x128xf32> to vector<16x128xf32>
    %13 = arith.addf %10, %12 : vector<16x128xf32>
    %cst_11 = arith.constant 0.000000e+00 : f32
    %14 = vector.broadcast %cst_11 : f32 to vector<16x128xf32>
    %15 = arith.maximumf %13, %14 : vector<16x128xf32>
    %16 = arith.truncf %15 : vector<16x128xf32> to vector<16x128xbf16>
    %c0_12 = arith.constant 0 : index
    %c0_13 = arith.constant 0 : index
    %17 = vector.load %arg7[%c0_12, %c0_13] : memref<128x128xbf16, #tpu.memory_space<vmem>>, vector<128x128xbf16>
    %cst_14 = arith.constant dense<0.000000e+00> : vector<16x128xf32>
    %18 = tpu.matmul %16, %17, %cst_14 {dimension_numbers = #tpu.dot_dimension_numbers<[1], [0], [0], [1], [0, 0, 1, 1], [], []>} : vector<16x128xbf16>, vector<128x128xbf16>, vector<16x128xf32> -> vector<16x128xf32>
    %c0_15 = arith.constant 0 : index
    %c0_16 = arith.constant 0 : index
    %19 = vector.load %arg8[%c0_15, %c0_16] : memref<1x128xf32, #tpu.memory_space<vmem>>, vector<1x128xf32>
    %20 = vector.broadcast %19 : vector<1x128xf32> to vector<16x128xf32>
    %21 = arith.addf %18, %20 : vector<16x128xf32>
    %22 = vector.extract_strided_slice %21 {offsets = [0, 0], sizes = [16, 2], strides = [1, 1]} : vector<16x128xf32> to vector<16x2xf32>
    %23 = vector.extract_strided_slice %21 {offsets = [0, 2], sizes = [16, 2], strides = [1, 1]} : vector<16x128xf32> to vector<16x2xf32>
    %cst_17 = arith.constant 5.000000e-01 : f32
    %24 = vector.broadcast %cst_17 : f32 to vector<16x2xf32>
    %25 = arith.mulf %24, %23 : vector<16x2xf32>
    %26 = math.exp %25 : vector<16x2xf32>
    %c0_18 = arith.constant 0 : index
    %c0_19 = arith.constant 0 : index
    %27 = vector.load %arg2[%c0_18, %c0_19] : memref<16x2xf32, #tpu.memory_space<vmem>>, vector<16x2xf32>
    %28 = arith.mulf %26, %27 : vector<16x2xf32>
    %29 = arith.addf %22, %28 : vector<16x2xf32>
    %c0_20 = arith.constant 0 : index
    %c0_21 = arith.constant 0 : index
    %30 = vector.load %arg9[%c0_20, %c0_21] : memref<2x128xf32, #tpu.memory_space<vmem>>, vector<2x128xf32>
    %c0_22 = arith.constant 0 : index
    %c0_23 = arith.constant 0 : index
    %31 = vector.load %arg10[%c0_22, %c0_23] : memref<1x128xf32, #tpu.memory_space<vmem>>, vector<1x128xf32>
    %32 = vector.extract_strided_slice %29 {offsets = [0, 0], sizes = [16, 1], strides = [1, 1]} : vector<16x2xf32> to vector<16x1xf32>
    %33 = vector.extract_strided_slice %30 {offsets = [0, 0], sizes = [1, 128], strides = [1, 1]} : vector<2x128xf32> to vector<1x128xf32>
    %34 = vector.broadcast %32 : vector<16x1xf32> to vector<16x128xf32>
    %35 = vector.broadcast %33 : vector<1x128xf32> to vector<16x128xf32>
    %36 = arith.mulf %34, %35 : vector<16x128xf32>
    %37 = vector.broadcast %31 : vector<1x128xf32> to vector<16x128xf32>
    %38 = arith.addf %37, %36 : vector<16x128xf32>
    %39 = vector.extract_strided_slice %29 {offsets = [0, 1], sizes = [16, 1], strides = [1, 1]} : vector<16x2xf32> to vector<16x1xf32>
    %40 = vector.extract_strided_slice %30 {offsets = [1, 0], sizes = [1, 128], strides = [1, 1]} : vector<2x128xf32> to vector<1x128xf32>
    %41 = vector.broadcast %39 : vector<16x1xf32> to vector<16x128xf32>
    %42 = vector.broadcast %40 : vector<1x128xf32> to vector<16x128xf32>
    %43 = arith.mulf %41, %42 : vector<16x128xf32>
    %44 = arith.addf %38, %43 : vector<16x128xf32>
    %cst_24 = arith.constant 0.000000e+00 : f32
    %45 = vector.broadcast %cst_24 : f32 to vector<16x128xf32>
    %46 = arith.maximumf %44, %45 : vector<16x128xf32>
    %47 = arith.truncf %46 : vector<16x128xf32> to vector<16x128xbf16>
    %c0_25 = arith.constant 0 : index
    %c0_26 = arith.constant 0 : index
    %48 = vector.load %arg11[%c0_25, %c0_26] : memref<128x256xbf16, #tpu.memory_space<vmem>>, vector<128x256xbf16>
    %cst_27 = arith.constant dense<0.000000e+00> : vector<16x256xf32>
    %49 = tpu.matmul %47, %48, %cst_27 {dimension_numbers = #tpu.dot_dimension_numbers<[1], [0], [0], [1], [0, 0, 1, 1], [], []>} : vector<16x128xbf16>, vector<128x256xbf16>, vector<16x256xf32> -> vector<16x256xf32>
    %c0_28 = arith.constant 0 : index
    %c0_29 = arith.constant 0 : index
    %50 = vector.load %arg12[%c0_28, %c0_29] : memref<1x256xf32, #tpu.memory_space<vmem>>, vector<1x256xf32>
    %51 = vector.broadcast %50 : vector<1x256xf32> to vector<16x256xf32>
    %52 = arith.addf %49, %51 : vector<16x256xf32>
    %cst_30 = arith.constant 0.000000e+00 : f32
    %53 = vector.broadcast %cst_30 : f32 to vector<16x256xf32>
    %54 = arith.maximumf %52, %53 : vector<16x256xf32>
    %55 = arith.truncf %54 : vector<16x256xf32> to vector<16x256xbf16>
    %c0_31 = arith.constant 0 : index
    %c0_32 = arith.constant 0 : index
    %56 = vector.load %arg13[%c0_31, %c0_32] : memref<256x896xbf16, #tpu.memory_space<vmem>>, vector<256x896xbf16>
    %cst_33 = arith.constant dense<0.000000e+00> : vector<16x896xf32>
    %57 = tpu.matmul %55, %56, %cst_33 {dimension_numbers = #tpu.dot_dimension_numbers<[1], [0], [0], [1], [0, 0, 1, 1], [], []>} : vector<16x256xbf16>, vector<256x896xbf16>, vector<16x896xf32> -> vector<16x896xf32>
    %c0_34 = arith.constant 0 : index
    %c0_35 = arith.constant 0 : index
    %58 = vector.load %arg14[%c0_34, %c0_35] : memref<1x896xf32, #tpu.memory_space<vmem>>, vector<1x896xf32>
    %59 = vector.broadcast %58 : vector<1x896xf32> to vector<16x896xf32>
    %60 = arith.addf %57, %59 : vector<16x896xf32>
    %61 = arith.negf %60 : vector<16x896xf32>
    %62 = math.exp %61 : vector<16x896xf32>
    %cst_36 = arith.constant 1.000000e+00 : f32
    %63 = vector.broadcast %cst_36 : f32 to vector<16x896xf32>
    %64 = arith.addf %63, %62 : vector<16x896xf32>
    %65 = arith.divf %63, %64 : vector<16x896xf32>
    %c0_37 = arith.constant 0 : index
    %c0_38 = arith.constant 0 : index
    %66 = vector.load %arg15[%c0_37, %c0_38] : memref<16x896xf32, #tpu.memory_space<vmem>>, vector<16x896xf32>
    tpu.vector_store %arg15[%c0_37, %c0_38], %65 {strides = array<i32>} : memref<16x896xf32, #tpu.memory_space<vmem>>, vector<16x896xf32>,
    %c0_39 = arith.constant 0 : index
    %c0_40 = arith.constant 0 : index
    %67 = vector.load %arg16[%c0_39, %c0_40] : memref<16x128xf32, #tpu.memory_space<vmem>>, vector<16x128xf32>
    tpu.vector_store %arg16[%c0_39, %c0_40], %21 {strides = array<i32>} : memref<16x128xf32, #tpu.memory_space<vmem>>, vector<16x128xf32>,
    return
  }
  func.func @transform_0(%arg0: i32) -> (i32, i32) {
    %c0_i32 = arith.constant 0 : i32
    %c0_i32_0 = arith.constant 0 : i32
    return %arg0, %c0_i32 : i32, i32
  }
  func.func @transform_1(%arg0: i32) -> (i32, i32) {
    %c0_i32 = arith.constant 0 : i32
    %c0_i32_0 = arith.constant 0 : i32
    return %arg0, %c0_i32 : i32, i32
  }
  func.func @transform_2(%arg0: i32) -> (i32, i32) {
    %c0_i32 = arith.constant 0 : i32
    %c0_i32_0 = arith.constant 0 : i32
    %c0_i32_1 = arith.constant 0 : i32
    return %c0_i32, %c0_i32_0 : i32, i32
  }
  func.func @transform_3(%arg0: i32) -> (i32, i32) {
    %c0_i32 = arith.constant 0 : i32
    %c0_i32_0 = arith.constant 0 : i32
    %c0_i32_1 = arith.constant 0 : i32
    return %c0_i32, %c0_i32_0 : i32, i32
  }
  func.func @transform_4(%arg0: i32) -> (i32, i32) {
    %c0_i32 = arith.constant 0 : i32
    %c0_i32_0 = arith.constant 0 : i32
    %c0_i32_1 = arith.constant 0 : i32
    return %c0_i32, %c0_i32_0 : i32, i32
  }
  func.func @transform_5(%arg0: i32) -> (i32, i32) {
    %c0_i32 = arith.constant 0 : i32
    %c0_i32_0 = arith.constant 0 : i32
    %c0_i32_1 = arith.constant 0 : i32
    return %c0_i32, %c0_i32_0 : i32, i32
  }
  func.func @transform_6(%arg0: i32) -> (i32, i32) {
    %c0_i32 = arith.constant 0 : i32
    %c0_i32_0 = arith.constant 0 : i32
    %c0_i32_1 = arith.constant 0 : i32
    return %c0_i32, %c0_i32_0 : i32, i32
  }
  func.func @transform_7(%arg0: i32) -> (i32, i32) {
    %c0_i32 = arith.constant 0 : i32
    %c0_i32_0 = arith.constant 0 : i32
    %c0_i32_1 = arith.constant 0 : i32
    return %c0_i32, %c0_i32_0 : i32, i32
  }
  func.func @transform_8(%arg0: i32) -> (i32, i32) {
    %c0_i32 = arith.constant 0 : i32
    %c0_i32_0 = arith.constant 0 : i32
    %c0_i32_1 = arith.constant 0 : i32
    return %c0_i32, %c0_i32_0 : i32, i32
  }
  func.func @transform_9(%arg0: i32) -> (i32, i32) {
    %c0_i32 = arith.constant 0 : i32
    %c0_i32_0 = arith.constant 0 : i32
    %c0_i32_1 = arith.constant 0 : i32
    return %c0_i32, %c0_i32_0 : i32, i32
  }
  func.func @transform_10(%arg0: i32) -> (i32, i32) {
    %c0_i32 = arith.constant 0 : i32
    %c0_i32_0 = arith.constant 0 : i32
    %c0_i32_1 = arith.constant 0 : i32
    return %c0_i32, %c0_i32_0 : i32, i32
  }
  func.func @transform_11(%arg0: i32) -> (i32, i32) {
    %c0_i32 = arith.constant 0 : i32
    %c0_i32_0 = arith.constant 0 : i32
    %c0_i32_1 = arith.constant 0 : i32
    return %c0_i32, %c0_i32_0 : i32, i32
  }
  func.func @transform_12(%arg0: i32) -> (i32, i32) {
    %c0_i32 = arith.constant 0 : i32
    %c0_i32_0 = arith.constant 0 : i32
    %c0_i32_1 = arith.constant 0 : i32
    return %c0_i32, %c0_i32_0 : i32, i32
  }
  func.func @transform_13(%arg0: i32) -> (i32, i32) {
    %c0_i32 = arith.constant 0 : i32
    %c0_i32_0 = arith.constant 0 : i32
    %c0_i32_1 = arith.constant 0 : i32
    return %c0_i32, %c0_i32_0 : i32, i32
  }
  func.func @transform_14(%arg0: i32) -> (i32, i32) {
    %c0_i32 = arith.constant 0 : i32
    %c0_i32_0 = arith.constant 0 : i32
    return %arg0, %c0_i32 : i32, i32
  }
  func.func @transform_15(%arg0: i32) -> (i32, i32) {
    %c0_i32 = arith.constant 0 : i32
    %c0_i32_0 = arith.constant 0 : i32
    return %arg0, %c0_i32 : i32, i32
  }
}

</mosaic_0001>

<llo_original>
// kernel: vae_forward.1
$region0: #{vae_forward.1}
  #allocation0 [shape = 'u32[]', space=smem, size = 0x4, offset = 0x4, fixed_abs, tag = 'smem constant byte address 0x4 - core index']
  #allocation1 [shape = 'u32[144,128]{1,0:T(1,128)}', space=vmem, size = 0x12000, scoped, tag = 'internal scratch']
  %s0 = inlined_call_operand.vmem [shape: bf16[16,896], index: 0, kind: input, shape index: {}]
  %s1 = inlined_call_operand.vmem [shape: f32[16,2], index: 1, kind: input, shape index: {}]
  %s2 = inlined_call_operand.hbm [shape: bf16[896,256], index: 2, kind: input, shape index: {}]
  %s3 = inlined_call_operand.vmem [shape: f32[1,256], index: 3, kind: input, shape index: {}]
  %s4 = inlined_call_operand.vmem [shape: bf16[256,128], index: 4, kind: input, shape index: {}]
  %s5 = inlined_call_operand.vmem [shape: f32[1,128], index: 5, kind: input, shape index: {}]
  %s6 = inlined_call_operand.vmem [shape: bf16[128,128], index: 6, kind: input, shape index: {}]
  %s7 = inlined_call_operand.vmem [shape: f32[1,128], index: 7, kind: input, shape index: {}]
  %s8 = inlined_call_operand.vmem [shape: f32[2,128], index: 8, kind: input, shape index: {}]
  %s9 = inlined_call_operand.vmem [shape: f32[1,128], index: 9, kind: input, shape index: {}]
  %s10 = inlined_call_operand.vmem [shape: bf16[128,256], index: 10, kind: input, shape index: {}]
  %s11 = inlined_call_operand.vmem [shape: f32[1,256], index: 11, kind: input, shape index: {}]
  %s12 = inlined_call_operand.hbm [shape: bf16[256,896], index: 12, kind: input, shape index: {}]
  %s13 = inlined_call_operand.vmem [shape: f32[1,896], index: 13, kind: input, shape index: {}]
  %s14 = inlined_call_operand.vmem [shape: f32[16,896], index: 14, kind: output, shape index: {0}]
  %s15 = inlined_call_operand.vmem [shape: f32[16,128], index: 15, kind: output, shape index: {1}]
  %16 = xla_tuple %s14, %s15
  %s17 = sld [smem:[#allocation0]]
  $region82: #{vae_forward.1} parent=0
    _
  %s19 = ssub.s32 1, %s17
  %s20 = scalar_select 0, %s19, %s17
  $region1: #{vae_forward.1} parent=0
    #allocation2 [shape = 'u8[458752]{0}', space=vmem, size = 0x70000, scoped, tag = 'input window, operand 2, single buffered']
    #allocation3 [shape = 's32[1]{0}', space=sflag, size = 0x4, scoped, tag = 'scoped memory for vae_forward.1']
    #allocation4 [shape = 'u8[458752]{0}', space=vmem, size = 0x70000, scoped, tag = 'input window, operand 12, single buffered']
    #allocation5 [shape = 's32[1]{0}', space=sflag, size = 0x4, scoped, tag = 'scoped memory for vae_forward.1']
    %21 = vsyncpa [#allocation3], 0
    %22 = vsyncpa [#allocation5], 0
    // Predicated region
    $region2: #{vae_forward.1} parent=1 // pred_check
      _
    $region3: #{vae_forward.1} parent=1 // pred_check_branch
      %24 = sbr.rel (0) target = $region5
    $region4: #{vae_forward.1} parent=1 // pred_region
      _
    $region5: #{vae_forward.1} parent=1 // pred_fallthru
      _
    // Predicated region
    $region6: #{vae_forward.1} parent=1 // pred_check
      _
    $region7: #{vae_forward.1} parent=1 // pred_check_branch
      %26 = sbr.rel (0) target = $region9
    $region8: #{vae_forward.1} parent=1 // pred_region
      _
    $region9: #{vae_forward.1} parent=1 // pred_fallthru
      _
    // Predicated region
    $region10: #{vae_forward.1} parent=1 // pred_check
      _
    $region11: #{vae_forward.1} parent=1 // pred_check_branch
      %28 = sbr.rel (0) target = $region13
    $region12: #{vae_forward.1} parent=1 // pred_region
      %s30 = ssub.s32 14336, 14336
      %31 = vsyncadd [#allocation3], %s30
      %s32 = sshll.u32 [#allocation2], 4
      %s33 = int_to_ptr.vmem [resolvable:$true] %s32
      %38 = dma.hbm_to_vmem [thread:$0]  %s2, 14336, %s33, [#allocation3], 128, 128, 8
    $region13: #{vae_forward.1} parent=1 // pred_fallthru
      _
    // Predicated region
    $region14: #{vae_forward.1} parent=1 // pred_check
      _
    $region15: #{vae_forward.1} parent=1 // pred_check_branch
      %40 = sbr.rel (0) target = $region17
    $region16: #{vae_forward.1} parent=1 // pred_region
      _
    $region17: #{vae_forward.1} parent=1 // pred_fallthru
      _
    // Predicated region
    $region18: #{vae_forward.1} parent=1 // pred_check
      _
    $region19: #{vae_forward.1} parent=1 // pred_check_branch
      %42 = sbr.rel (0) target = $region21
    $region20: #{vae_forward.1} parent=1 // pred_region
      _
    $region21: #{vae_forward.1} parent=1 // pred_fallthru
      _
    // Predicated region
    $region22: #{vae_forward.1} parent=1 // pred_check
      _
    $region23: #{vae_forward.1} parent=1 // pred_check_branch
      %44 = sbr.rel (0) target = $region25
    $region24: #{vae_forward.1} parent=1 // pred_region
      _
    $region25: #{vae_forward.1} parent=1 // pred_fallthru
      _
    // Predicated region
    $region26: #{vae_forward.1} parent=1 // pred_check
      _
    $region27: #{vae_forward.1} parent=1 // pred_check_branch
      %46 = sbr.rel (0) target = $region29
    $region28: #{vae_forward.1} parent=1 // pred_region
      _
    $region29: #{vae_forward.1} parent=1 // pred_fallthru
      _
    // Predicated region
    $region30: #{vae_forward.1} parent=1 // pred_check
      _
    $region31: #{vae_forward.1} parent=1 // pred_check_branch
      %48 = sbr.rel (0) target = $region33
    $region32: #{vae_forward.1} parent=1 // pred_region
      _
    $region33: #{vae_forward.1} parent=1 // pred_fallthru
      _
    // Predicated region
    $region34: #{vae_forward.1} parent=1 // pred_check
      _
    $region35: #{vae_forward.1} parent=1 // pred_check_branch
      %50 = sbr.rel (0) target = $region37
    $region36: #{vae_forward.1} parent=1 // pred_region
      _
    $region37: #{vae_forward.1} parent=1 // pred_fallthru
      _
    // Predicated region
    $region38: #{vae_forward.1} parent=1 // pred_check
      _
    $region39: #{vae_forward.1} parent=1 // pred_check_branch
      %52 = sbr.rel (0) target = $region41
    $region40: #{vae_forward.1} parent=1 // pred_region
      _
    $region41: #{vae_forward.1} parent=1 // pred_fallthru
      _
    // Predicated region
    $region42: #{vae_forward.1} parent=1 // pred_check
      _
    $region43: #{vae_forward.1} parent=1 // pred_check_branch
      %54 = sbr.rel (0) target = $region45
    $region44: #{vae_forward.1} parent=1 // pred_region
      _
    $region45: #{vae_forward.1} parent=1 // pred_fallthru
      _
    // Predicated region
    $region46: #{vae_forward.1} parent=1 // pred_check
      _
    $region47: #{vae_forward.1} parent=1 // pred_check_branch
      %56 = sbr.rel (0) target = $region49
    $region48: #{vae_forward.1} parent=1 // pred_region
      _
    $region49: #{vae_forward.1} parent=1 // pred_fallthru
      _
    // Predicated region
    $region50: #{vae_forward.1} parent=1 // pred_check
      _
    $region51: #{vae_forward.1} parent=1 // pred_check_branch
      %58 = sbr.rel (0) target = $region53
    $region52: #{vae_forward.1} parent=1 // pred_region
      %s60 = ssub.s32 14336, 14336
      %61 = vsyncadd [#allocation5], %s60
      %s62 = sshll.u32 [#allocation4], 4
      %s63 = int_to_ptr.vmem [resolvable:$true] %s62
      %68 = dma.hbm_to_vmem [thread:$0]  %s12, 14336, %s63, [#allocation5], 448, 448, 28
    $region53: #{vae_forward.1} parent=1 // pred_fallthru
      _
    // Predicated region
    $region54: #{vae_forward.1} parent=1 // pred_check
      _
    $region55: #{vae_forward.1} parent=1 // pred_check_branch
      %70 = sbr.rel (0) target = $region57
    $region56: #{vae_forward.1} parent=1 // pred_region
      _
    $region57: #{vae_forward.1} parent=1 // pred_fallthru
      _
    // Predicated region
    $region58: #{vae_forward.1} parent=1 // pred_check
      _
    $region59: #{vae_forward.1} parent=1 // pred_check_branch
      %72 = sbr.rel (0) target = $region61
    $region60: #{vae_forward.1} parent=1 // pred_region
      %73 = dma.done [#allocation3], 14336
    $region61: #{vae_forward.1} parent=1 // pred_fallthru
      _
    // Predicated region
    $region62: #{vae_forward.1} parent=1 // pred_check
      _
    $region63: #{vae_forward.1} parent=1 // pred_check_branch
      %75 = sbr.rel (0) target = $region65
    $region64: #{vae_forward.1} parent=1 // pred_region
      %76 = dma.done [#allocation5], 14336
    $region65: #{vae_forward.1} parent=1 // pred_fallthru
      _
    %v78 = vld [vmem:[%s0] sm:$0xff]
    %v79 = vld [vmem:[%s0 + $0x8] sm:$0xff]
    %v80 = vld [vmem:[%s0 + $0x10] sm:$0xff]
    %v81 = vld [vmem:[%s0 + $0x18] sm:$0xf]
    %v82 = vld [vmem:[%s0 + $0x1c] sm:$0xff]
    %v83 = vld [vmem:[%s0 + $0x24] sm:$0xff]
    %v84 = vld [vmem:[%s0 + $0x2c] sm:$0xff]
    %v85 = vld [vmem:[%s0 + $0x34] sm:$0xf]
    %v86 = vld [vmem:[#allocation2] sm:$0xff]
    %v87 = vld [vmem:[#allocation2 + $0x8] sm:$0xff]
    %v88 = vld [vmem:[#allocation2 + $0x10] sm:$0xff]
    %v89 = vld [vmem:[#allocation2 + $0x18] sm:$0xff]
    %v90 = vld [vmem:[#allocation2 + $0x20] sm:$0xff]
    %v91 = vld [vmem:[#allocation2 + $0x28] sm:$0xff]
    %v92 = vld [vmem:[#allocation2 + $0x30] sm:$0xff]
    %v93 = vld [vmem:[#allocation2 + $0x38] sm:$0xff]
    %v94 = vld [vmem:[#allocation2 + $0x40] sm:$0xff]
    %v95 = vld [vmem:[#allocation2 + $0x48] sm:$0xff]
    %v96 = vld [vmem:[#allocation2 + $0x50] sm:$0xff]
    %v97 = vld [vmem:[#allocation2 + $0x58] sm:$0xff]
    %v98 = vld [vmem:[#allocation2 + $0x60] sm:$0xff]
    %v99 = vld [vmem:[#allocation2 + $0x68] sm:$0xff]
    %v100 = vld [vmem:[#allocation2 + $0x70] sm:$0xff]
    %v101 = vld [vmem:[#allocation2 + $0x78] sm:$0xff]
    %v102 = vld [vmem:[#allocation2 + $0x80] sm:$0xff]
    %v103 = vld [vmem:[#allocation2 + $0x88] sm:$0xff]
    %v104 = vld [vmem:[#allocation2 + $0x90] sm:$0xff]
    %v105 = vld [vmem:[#allocation2 + $0x98] sm:$0xff]
    %v106 = vld [vmem:[#allocation2 + $0xa0] sm:$0xff]
    %v107 = vld [vmem:[#allocation2 + $0xa8] sm:$0xff]
    %v108 = vld [vmem:[#allocation2 + $0xb0] sm:$0xff]
    %v109 = vld [vmem:[#allocation2 + $0xb8] sm:$0xff]
    %v110 = vld [vmem:[#allocation2 + $0xc0] sm:$0xff]
    %v111 = vld [vmem:[#allocation2 + $0xc8] sm:$0xff]
    %v112 = vld [vmem:[#allocation2 + $0xd0] sm:$0xff]
    %v113 = vld [vmem:[#allocation2 + $0xd8] sm:$0xff]
    %v114 = vld [vmem:[#allocation2 + $0xe0] sm:$0xff]
    %v115 = vld [vmem:[#allocation2 + $0xe8] sm:$0xff]
    %v116 = vld [vmem:[#allocation2 + $0xf0] sm:$0xff]
    %v117 = vld [vmem:[#allocation2 + $0xf8] sm:$0xff]
    %v118 = vld [vmem:[#allocation2 + $0x100] sm:$0xff]
    %v119 = vld [vmem:[#allocation2 + $0x108] sm:$0xff]
    %v120 = vld [vmem:[#allocation2 + $0x110] sm:$0xff]
    %v121 = vld [vmem:[#allocation2 + $0x118] sm:$0xff]
    %v122 = vld [vmem:[#allocation2 + $0x120] sm:$0xff]
    %v123 = vld [vmem:[#allocation2 + $0x128] sm:$0xff]
    %v124 = vld [vmem:[#allocation2 + $0x130] sm:$0xff]
    %v125 = vld [vmem:[#allocation2 + $0x138] sm:$0xff]
    %v126 = vld [vmem:[#allocation2 + $0x140] sm:$0xff]
    %v127 = vld [vmem:[#allocation2 + $0x148] sm:$0xff]
    %v128 = vld [vmem:[#allocation2 + $0x150] sm:$0xff]
    %v129 = vld [vmem:[#allocation2 + $0x158] sm:$0xff]
    %v130 = vld [vmem:[#allocation2 + $0x160] sm:$0xff]
    %v131 = vld [vmem:[#allocation2 + $0x168] sm:$0xff]
    %v132 = vld [vmem:[#allocation2 + $0x170] sm:$0xff]
    %v133 = vld [vmem:[#allocation2 + $0x178] sm:$0xff]
    %v134 = vld [vmem:[#allocation2 + $0x180] sm:$0xff]
    %v135 = vld [vmem:[#allocation2 + $0x188] sm:$0xff]
    %v136 = vld [vmem:[#allocation2 + $0x190] sm:$0xff]
    %v137 = vld [vmem:[#allocation2 + $0x198] sm:$0xff]
    %v138 = vld [vmem:[#allocation2 + $0x1a0] sm:$0xff]
    %v139 = vld [vmem:[#allocation2 + $0x1a8] sm:$0xff]
    %v140 = vld [vmem:[#allocation2 + $0x1b0] sm:$0xff]
    %v141 = vld [vmem:[#allocation2 + $0x1b8] sm:$0xff]
    %v142 = vld [vmem:[#allocation2 + $0x1c0] sm:$0xff]
    %v143 = vld [vmem:[#allocation2 + $0x1c8] sm:$0xff]
    %v144 = vld [vmem:[#allocation2 + $0x1d0] sm:$0xff]
    %v145 = vld [vmem:[#allocation2 + $0x1d8] sm:$0xff]
    %v146 = vld [vmem:[#allocation2 + $0x1e0] sm:$0xff]
    %v147 = vld [vmem:[#allocation2 + $0x1e8] sm:$0xff]
    %v148 = vld [vmem:[#allocation2 + $0x1f0] sm:$0xff]
    %v149 = vld [vmem:[#allocation2 + $0x1f8] sm:$0xff]
    %v150 = vld [vmem:[#allocation2 + $0x200] sm:$0xff]
    %v151 = vld [vmem:[#allocation2 + $0x208] sm:$0xff]
    %v152 = vld [vmem:[#allocation2 + $0x210] sm:$0xff]
    %v153 = vld [vmem:[#allocation2 + $0x218] sm:$0xff]
    %v154 = vld [vmem:[#allocation2 + $0x220] sm:$0xff]
    %v155 = vld [vmem:[#allocation2 + $0x228] sm:$0xff]
    %v156 = vld [vmem:[#allocation2 + $0x230] sm:$0xff]
    %v157 = vld [vmem:[#allocation2 + $0x238] sm:$0xff]
    %v158 = vld [vmem:[#allocation2 + $0x240] sm:$0xff]
    %v159 = vld [vmem:[#allocation2 + $0x248] sm:$0xff]
    %v160 = vld [vmem:[#allocation2 + $0x250] sm:$0xff]
    %v161 = vld [vmem:[#allocation2 + $0x258] sm:$0xff]
    %v162 = vld [vmem:[#allocation2 + $0x260] sm:$0xff]
    %v163 = vld [vmem:[#allocation2 + $0x268] sm:$0xff]
    %v164 = vld [vmem:[#allocation2 + $0x270] sm:$0xff]
    %v165 = vld [vmem:[#allocation2 + $0x278] sm:$0xff]
    %v166 = vld [vmem:[#allocation2 + $0x280] sm:$0xff]
    %v167 = vld [vmem:[#allocation2 + $0x288] sm:$0xff]
    %v168 = vld [vmem:[#allocation2 + $0x290] sm:$0xff]
    %v169 = vld [vmem:[#allocation2 + $0x298] sm:$0xff]
    %v170 = vld [vmem:[#allocation2 + $0x2a0] sm:$0xff]
    %v171 = vld [vmem:[#allocation2 + $0x2a8] sm:$0xff]
    %v172 = vld [vmem:[#allocation2 + $0x2b0] sm:$0xff]
    %v173 = vld [vmem:[#allocation2 + $0x2b8] sm:$0xff]
    %v174 = vld [vmem:[#allocation2 + $0x2c0] sm:$0xff]
    %v175 = vld [vmem:[#allocation2 + $0x2c8] sm:$0xff]
    %v176 = vld [vmem:[#allocation2 + $0x2d0] sm:$0xff]
    %v177 = vld [vmem:[#allocation2 + $0x2d8] sm:$0xff]
    %v178 = vld [vmem:[#allocation2 + $0x2e0] sm:$0xff]
    %v179 = vld [vmem:[#allocation2 + $0x2e8] sm:$0xff]
    %v180 = vld [vmem:[#allocation2 + $0x2f0] sm:$0xff]
    %v181 = vld [vmem:[#allocation2 + $0x2f8] sm:$0xff]
    %v182 = vld [vmem:[#allocation2 + $0x300] sm:$0xff]
    %v183 = vld [vmem:[#allocation2 + $0x308] sm:$0xff]
    %v184 = vld [vmem:[#allocation2 + $0x310] sm:$0xff]
    %v185 = vld [vmem:[#allocation2 + $0x318] sm:$0xff]
    %v186 = vld [vmem:[#allocation2 + $0x320] sm:$0xff]
    %v187 = vld [vmem:[#allocation2 + $0x328] sm:$0xff]
    %v188 = vld [vmem:[#allocation2 + $0x330] sm:$0xff]
    %v189 = vld [vmem:[#allocation2 + $0x338] sm:$0xff]
    %v190 = vld [vmem:[#allocation2 + $0x340] sm:$0xff]
    %v191 = vld [vmem:[#allocation2 + $0x348] sm:$0xff]
    %v192 = vld [vmem:[#allocation2 + $0x350] sm:$0xff]
    %v193 = vld [vmem:[#allocation2 + $0x358] sm:$0xff]
    %v194 = vld [vmem:[#allocation2 + $0x360] sm:$0xff]
    %v195 = vld [vmem:[#allocation2 + $0x368] sm:$0xff]
    %v196 = vld [vmem:[#allocation2 + $0x370] sm:$0xff]
    %v197 = vld [vmem:[#allocation2 + $0x378] sm:$0xff]
    %v198 = vld [vmem:[%s3] sm:$0x3]
    %v200 = vlaneseq
    %v201 = vshrl.u32 %v200, 7
    %v202 = vsub.s32 0, %v201
    %v203 = vrot.slane %v198, %v202
    %v204 = vlaneseq
    %v205 = vshrl.u32 %v204, 7
    %v206 = vsub.s32 1, %v205
    %v207 = vrot.slane %v198, %v206
    %v218 = vunpack.c.l.b16 %v78
    %v219 = vunpack.c.h.b16 %v78
    %v220 = vunpack.c.l.b16 %v79
    %v221 = vunpack.c.h.b16 %v79
    %v222 = vunpack.c.l.b16 %v80
    %v223 = vunpack.c.h.b16 %v80
    %v224 = vunpack.c.l.b16 %v81
    %v225 = vunpack.c.l.b16 %v82
    %v226 = vunpack.c.h.b16 %v82
    %v227 = vunpack.c.l.b16 %v83
    %v228 = vunpack.c.h.b16 %v83
    %v229 = vunpack.c.l.b16 %v84
    %v230 = vunpack.c.h.b16 %v84
    %v231 = vunpack.c.l.b16 %v85
    %v232 = vpack.c.b16 %v225, %v218
    %v233 = vpack.c.b16 %v226, %v219
    %v234 = vpack.c.b16 %v227, %v220
    %v235 = vpack.c.b16 %v228, %v221
    %v236 = vpack.c.b16 %v229, %v222
    %v237 = vpack.c.b16 %v230, %v223
    %v238 = vpack.c.b16 %v231, %v224
    %v358 = vunpack.c.l.b16 %v86
    %v359 = vunpack.c.h.b16 %v86
    %v360 = vunpack.c.l.b16 %v87
    %v361 = vunpack.c.h.b16 %v87
    %v362 = vunpack.c.l.b16 %v88
    %v363 = vunpack.c.h.b16 %v88
    %v364 = vunpack.c.l.b16 %v89
    %v365 = vunpack.c.h.b16 %v89
    %v366 = vunpack.c.l.b16 %v90
    %v367 = vunpack.c.h.b16 %v90
    %v368 = vunpack.c.l.b16 %v91
    %v369 = vunpack.c.h.b16 %v91
    %v370 = vunpack.c.l.b16 %v92
    %v371 = vunpack.c.h.b16 %v92
    %v372 = vunpack.c.l.b16 %v93
    %v373 = vunpack.c.h.b16 %v93
    %v374 = vunpack.c.l.b16 %v94
    %v375 = vunpack.c.h.b16 %v94
    %v376 = vunpack.c.l.b16 %v95
    %v377 = vunpack.c.h.b16 %v95
    %v378 = vunpack.c.l.b16 %v96
    %v379 = vunpack.c.h.b16 %v96
    %v380 = vunpack.c.l.b16 %v97
    %v381 = vunpack.c.h.b16 %v97
    %v382 = vunpack.c.l.b16 %v98
    %v383 = vunpack.c.h.b16 %v98
    %v384 = vunpack.c.l.b16 %v99
    %v385 = vunpack.c.h.b16 %v99
    %v386 = vunpack.c.l.b16 %v100
    %v387 = vunpack.c.h.b16 %v100
    %v388 = vunpack.c.l.b16 %v101
    %v389 = vunpack.c.h.b16 %v101
    %v390 = vunpack.c.l.b16 %v102
    %v391 = vunpack.c.h.b16 %v102
    %v392 = vunpack.c.l.b16 %v103
    %v393 = vunpack.c.h.b16 %v103
    %v394 = vunpack.c.l.b16 %v104
    %v395 = vunpack.c.h.b16 %v104
    %v396 = vunpack.c.l.b16 %v105
    %v397 = vunpack.c.h.b16 %v105
    %v398 = vunpack.c.l.b16 %v106
    %v399 = vunpack.c.h.b16 %v106
    %v400 = vunpack.c.l.b16 %v107
    %v401 = vunpack.c.h.b16 %v107
    %v402 = vunpack.c.l.b16 %v108
    %v403 = vunpack.c.h.b16 %v108
    %v404 = vunpack.c.l.b16 %v109
    %v405 = vunpack.c.h.b16 %v109
    %v406 = vunpack.c.l.b16 %v110
    %v407 = vunpack.c.h.b16 %v110
    %v408 = vunpack.c.l.b16 %v111
    %v409 = vunpack.c.h.b16 %v111
    %v410 = vunpack.c.l.b16 %v112
    %v411 = vunpack.c.h.b16 %v112
    %v412 = vunpack.c.l.b16 %v113
    %v413 = vunpack.c.h.b16 %v113
    %v414 = vunpack.c.l.b16 %v114
    %v415 = vunpack.c.h.b16 %v114
    %v416 = vunpack.c.l.b16 %v115
    %v417 = vunpack.c.h.b16 %v115
    %v418 = vunpack.c.l.b16 %v116
    %v419 = vunpack.c.h.b16 %v116
    %v420 = vunpack.c.l.b16 %v117
    %v421 = vunpack.c.h.b16 %v117
    %v422 = vunpack.c.l.b16 %v118
    %v423 = vunpack.c.h.b16 %v118
    %v424 = vunpack.c.l.b16 %v119
    %v425 = vunpack.c.h.b16 %v119
    %v426 = vunpack.c.l.b16 %v120
    %v427 = vunpack.c.h.b16 %v120
    %v428 = vunpack.c.l.b16 %v121
    %v429 = vunpack.c.h.b16 %v121
    %v430 = vunpack.c.l.b16 %v122
    %v431 = vunpack.c.h.b16 %v122
    %v432 = vunpack.c.l.b16 %v123
    %v433 = vunpack.c.h.b16 %v123
    %v434 = vunpack.c.l.b16 %v124
    %v435 = vunpack.c.h.b16 %v124
    %v436 = vunpack.c.l.b16 %v125
    %v437 = vunpack.c.h.b16 %v125
    %v438 = vunpack.c.l.b16 %v126
    %v439 = vunpack.c.h.b16 %v126
    %v440 = vunpack.c.l.b16 %v127
    %v441 = vunpack.c.h.b16 %v127
    %v442 = vunpack.c.l.b16 %v128
    %v443 = vunpack.c.h.b16 %v128
    %v444 = vunpack.c.l.b16 %v129
    %v445 = vunpack.c.h.b16 %v129
    %v446 = vunpack.c.l.b16 %v130
    %v447 = vunpack.c.h.b16 %v130
    %v448 = vunpack.c.l.b16 %v131
    %v449 = vunpack.c.h.b16 %v131
    %v450 = vunpack.c.l.b16 %v132
    %v451 = vunpack.c.h.b16 %v132
    %v452 = vunpack.c.l.b16 %v133
    %v453 = vunpack.c.h.b16 %v133
    %v454 = vunpack.c.l.b16 %v134
    %v455 = vunpack.c.h.b16 %v134
    %v456 = vunpack.c.l.b16 %v135
    %v457 = vunpack.c.h.b16 %v135
    %v458 = vunpack.c.l.b16 %v136
    %v459 = vunpack.c.h.b16 %v136
    %v460 = vunpack.c.l.b16 %v137
    %v461 = vunpack.c.h.b16 %v137
    %v462 = vunpack.c.l.b16 %v138
    %v463 = vunpack.c.h.b16 %v138
    %v464 = vunpack.c.l.b16 %v139
    %v465 = vunpack.c.h.b16 %v139
    %v466 = vunpack.c.l.b16 %v140
    %v467 = vunpack.c.h.b16 %v140
    %v468 = vunpack.c.l.b16 %v141
    %v469 = vunpack.c.h.b16 %v141
    %v470 = vunpack.c.l.b16 %v142
    %v471 = vunpack.c.h.b16 %v142
    %v472 = vunpack.c.l.b16 %v143
    %v473 = vunpack.c.h.b16 %v143
    %v474 = vunpack.c.l.b16 %v144
    %v475 = vunpack.c.h.b16 %v144
    %v476 = vunpack.c.l.b16 %v145
    %v477 = vunpack.c.h.b16 %v145
    %v478 = vunpack.c.l.b16 %v146
    %v479 = vunpack.c.h.b16 %v146
    %v480 = vunpack.c.l.b16 %v147
    %v481 = vunpack.c.h.b16 %v147
    %v482 = vunpack.c.l.b16 %v148
    %v483 = vunpack.c.h.b16 %v148
    %v484 = vunpack.c.l.b16 %v149
    %v485 = vunpack.c.h.b16 %v149
    %v486 = vunpack.c.l.b16 %v150
    %v487 = vunpack.c.h.b16 %v150
    %v488 = vunpack.c.l.b16 %v151
    %v489 = vunpack.c.h.b16 %v151
    %v490 = vunpack.c.l.b16 %v152
    %v491 = vunpack.c.h.b16 %v152
    %v492 = vunpack.c.l.b16 %v153
    %v493 = vunpack.c.h.b16 %v153
    %v494 = vunpack.c.l.b16 %v154
    %v495 = vunpack.c.h.b16 %v154
    %v496 = vunpack.c.l.b16 %v155
    %v497 = vunpack.c.h.b16 %v155
    %v498 = vunpack.c.l.b16 %v156
    %v499 = vunpack.c.h.b16 %v156
    %v500 = vunpack.c.l.b16 %v157
    %v501 = vunpack.c.h.b16 %v157
    %v502 = vunpack.c.l.b16 %v158
    %v503 = vunpack.c.h.b16 %v158
    %v504 = vunpack.c.l.b16 %v159
    %v505 = vunpack.c.h.b16 %v159
    %v506 = vunpack.c.l.b16 %v160
    %v507 = vunpack.c.h.b16 %v160
    %v508 = vunpack.c.l.b16 %v161
    %v509 = vunpack.c.h.b16 %v161
    %v510 = vunpack.c.l.b16 %v162
    %v511 = vunpack.c.h.b16 %v162
    %v512 = vunpack.c.l.b16 %v163
    %v513 = vunpack.c.h.b16 %v163
    %v514 = vunpack.c.l.b16 %v164
    %v515 = vunpack.c.h.b16 %v164
    %v516 = vunpack.c.l.b16 %v165
    %v517 = vunpack.c.h.b16 %v165
    %v518 = vunpack.c.l.b16 %v166
    %v519 = vunpack.c.h.b16 %v166
    %v520 = vunpack.c.l.b16 %v167
    %v521 = vunpack.c.h.b16 %v167
    %v522 = vunpack.c.l.b16 %v168
    %v523 = vunpack.c.h.b16 %v168
    %v524 = vunpack.c.l.b16 %v169
    %v525 = vunpack.c.h.b16 %v169
    %v526 = vunpack.c.l.b16 %v170
    %v527 = vunpack.c.h.b16 %v170
    %v528 = vunpack.c.l.b16 %v171
    %v529 = vunpack.c.h.b16 %v171
    %v530 = vunpack.c.l.b16 %v172
    %v531 = vunpack.c.h.b16 %v172
    %v532 = vunpack.c.l.b16 %v173
    %v533 = vunpack.c.h.b16 %v173
    %v534 = vunpack.c.l.b16 %v174
    %v535 = vunpack.c.h.b16 %v174
    %v536 = vunpack.c.l.b16 %v175
    %v537 = vunpack.c.h.b16 %v175
    %v538 = vunpack.c.l.b16 %v176
    %v539 = vunpack.c.h.b16 %v176
    %v540 = vunpack.c.l.b16 %v177
    %v541 = vunpack.c.h.b16 %v177
    %v542 = vunpack.c.l.b16 %v178
    %v543 = vunpack.c.h.b16 %v178
    %v544 = vunpack.c.l.b16 %v179
    %v545 = vunpack.c.h.b16 %v179
    %v546 = vunpack.c.l.b16 %v180
    %v547 = vunpack.c.h.b16 %v180
    %v548 = vunpack.c.l.b16 %v181
    %v549 = vunpack.c.h.b16 %v181
    %v550 = vunpack.c.l.b16 %v182
    %v551 = vunpack.c.h.b16 %v182
    %v552 = vunpack.c.l.b16 %v183
    %v553 = vunpack.c.h.b16 %v183
    %v554 = vunpack.c.l.b16 %v184
    %v555 = vunpack.c.h.b16 %v184
    %v556 = vunpack.c.l.b16 %v185
    %v557 = vunpack.c.h.b16 %v185
    %v558 = vunpack.c.l.b16 %v186
    %v559 = vunpack.c.h.b16 %v186
    %v560 = vunpack.c.l.b16 %v187
    %v561 = vunpack.c.h.b16 %v187
    %v562 = vunpack.c.l.b16 %v188
    %v563 = vunpack.c.h.b16 %v188
    %v564 = vunpack.c.l.b16 %v189
    %v565 = vunpack.c.h.b16 %v189
    %v566 = vunpack.c.l.b16 %v190
    %v567 = vunpack.c.h.b16 %v190
    %v568 = vunpack.c.l.b16 %v191
    %v569 = vunpack.c.h.b16 %v191
    %v570 = vunpack.c.l.b16 %v192
    %v571 = vunpack.c.h.b16 %v192
    %v572 = vunpack.c.l.b16 %v193
    %v573 = vunpack.c.h.b16 %v193
    %v574 = vunpack.c.l.b16 %v194
    %v575 = vunpack.c.h.b16 %v194
    %v576 = vunpack.c.l.b16 %v195
    %v577 = vunpack.c.h.b16 %v195
    %v578 = vunpack.c.l.b16 %v196
    %v579 = vunpack.c.h.b16 %v196
    %v580 = vunpack.c.l.b16 %v197
    %v581 = vunpack.c.h.b16 %v197
    %v582 = vpack.c.b16 %v360, %v358
    %v583 = vpack.c.b16 %v361, %v359
    %v584 = vpack.c.b16 %v364, %v362
    %v585 = vpack.c.b16 %v365, %v363
    %v586 = vpack.c.b16 %v368, %v366
    %v587 = vpack.c.b16 %v369, %v367
    %v588 = vpack.c.b16 %v372, %v370
    %v589 = vpack.c.b16 %v373, %v371
    %v590 = vpack.c.b16 %v376, %v374
    %v591 = vpack.c.b16 %v377, %v375
    %v592 = vpack.c.b16 %v380, %v378
    %v593 = vpack.c.b16 %v381, %v379
    %v594 = vpack.c.b16 %v384, %v382
    %v595 = vpack.c.b16 %v385, %v383
    %v596 = vpack.c.b16 %v388, %v386
    %v597 = vpack.c.b16 %v389, %v387
    %v598 = vpack.c.b16 %v392, %v390
    %v599 = vpack.c.b16 %v393, %v391
    %v600 = vpack.c.b16 %v396, %v394
    %v601 = vpack.c.b16 %v397, %v395
    %v602 = vpack.c.b16 %v400, %v398
    %v603 = vpack.c.b16 %v401, %v399
    %v604 = vpack.c.b16 %v404, %v402
    %v605 = vpack.c.b16 %v405, %v403
    %v606 = vpack.c.b16 %v408, %v406
    %v607 = vpack.c.b16 %v409, %v407
    %v608 = vpack.c.b16 %v412, %v410
    %v609 = vpack.c.b16 %v413, %v411
    %v610 = vpack.c.b16 %v416, %v414
    %v611 = vpack.c.b16 %v417, %v415
    %v612 = vpack.c.b16 %v420, %v418
    %v613 = vpack.c.b16 %v421, %v419
    %v614 = vpack.c.b16 %v424, %v422
    %v615 = vpack.c.b16 %v425, %v423
    %v616 = vpack.c.b16 %v428, %v426
    %v617 = vpack.c.b16 %v429, %v427
    %v618 = vpack.c.b16 %v432, %v430
    %v619 = vpack.c.b16 %v433, %v431
    %v620 = vpack.c.b16 %v436, %v434
    %v621 = vpack.c.b16 %v437, %v435
    %v622 = vpack.c.b16 %v440, %v438
    %v623 = vpack.c.b16 %v441, %v439
    %v624 = vpack.c.b16 %v444, %v442
    %v625 = vpack.c.b16 %v445, %v443
    %v626 = vpack.c.b16 %v448, %v446
    %v627 = vpack.c.b16 %v449, %v447
    %v628 = vpack.c.b16 %v452, %v450
    %v629 = vpack.c.b16 %v453, %v451
    %v630 = vpack.c.b16 %v456, %v454
    %v631 = vpack.c.b16 %v457, %v455
    %v632 = vpack.c.b16 %v460, %v458
    %v633 = vpack.c.b16 %v461, %v459
    %v634 = vpack.c.b16 %v464, %v462
    %v635 = vpack.c.b16 %v465, %v463
    %v636 = vpack.c.b16 %v468, %v466
    %v637 = vpack.c.b16 %v469, %v467
    %v638 = vpack.c.b16 %v472, %v470
    %v639 = vpack.c.b16 %v473, %v471
    %v640 = vpack.c.b16 %v476, %v474
    %v641 = vpack.c.b16 %v477, %v475
    %v642 = vpack.c.b16 %v480, %v478
    %v643 = vpack.c.b16 %v481, %v479
    %v644 = vpack.c.b16 %v484, %v482
    %v645 = vpack.c.b16 %v485, %v483
    %v646 = vpack.c.b16 %v488, %v486
    %v647 = vpack.c.b16 %v489, %v487
    %v648 = vpack.c.b16 %v492, %v490
    %v649 = vpack.c.b16 %v493, %v491
    %v650 = vpack.c.b16 %v496, %v494
    %v651 = vpack.c.b16 %v497, %v495
    %v652 = vpack.c.b16 %v500, %v498
    %v653 = vpack.c.b16 %v501, %v499
    %v654 = vpack.c.b16 %v504, %v502
    %v655 = vpack.c.b16 %v505, %v503
    %v656 = vpack.c.b16 %v508, %v506
    %v657 = vpack.c.b16 %v509, %v507
    %v658 = vpack.c.b16 %v512, %v510
    %v659 = vpack.c.b16 %v513, %v511
    %v660 = vpack.c.b16 %v516, %v514
    %v661 = vpack.c.b16 %v517, %v515
    %v662 = vpack.c.b16 %v520, %v518
    %v663 = vpack.c.b16 %v521, %v519
    %v664 = vpack.c.b16 %v524, %v522
    %v665 = vpack.c.b16 %v525, %v523
    %v666 = vpack.c.b16 %v528, %v526
    %v667 = vpack.c.b16 %v529, %v527
    %v668 = vpack.c.b16 %v532, %v530
    %v669 = vpack.c.b16 %v533, %v531
    %v670 = vpack.c.b16 %v536, %v534
    %v671 = vpack.c.b16 %v537, %v535
    %v672 = vpack.c.b16 %v540, %v538
    %v673 = vpack.c.b16 %v541, %v539
    %v674 = vpack.c.b16 %v544, %v542
    %v675 = vpack.c.b16 %v545, %v543
    %v676 = vpack.c.b16 %v548, %v546
    %v677 = vpack.c.b16 %v549, %v547
    %v678 = vpack.c.b16 %v552, %v550
    %v679 = vpack.c.b16 %v553, %v551
    %v680 = vpack.c.b16 %v556, %v554
    %v681 = vpack.c.b16 %v557, %v555
    %v682 = vpack.c.b16 %v560, %v558
    %v683 = vpack.c.b16 %v561, %v559
    %v684 = vpack.c.b16 %v564, %v562
    %v685 = vpack.c.b16 %v565, %v563
    %v686 = vpack.c.b16 %v568, %v566
    %v687 = vpack.c.b16 %v569, %v567
    %v688 = vpack.c.b16 %v572, %v570
    %v689 = vpack.c.b16 %v573, %v571
    %v690 = vpack.c.b16 %v576, %v574
    %v691 = vpack.c.b16 %v577, %v575
    %v692 = vpack.c.b16 %v580, %v578
    %v693 = vpack.c.b16 %v581, %v579
    %806 = vmatprep.subr.bf16.mxu0 %v597
    %807 = vmatpush1.bf16.msra.mxu0 %v596
    %808 = vmatprep.subr.bf16.mxu0 %v595
    %809 = vmatpush1.bf16.msra.mxu0 %v594
    %810 = vmatprep.subr.bf16.mxu0 %v593
    %811 = vmatpush1.bf16.msra.mxu0 %v592
    %812 = vmatprep.subr.bf16.mxu0 %v591
    %813 = vmatpush1.bf16.msra.mxu0 %v590
    %814 = vmatprep.subr.bf16.mxu0 %v589
    %815 = vmatpush1.bf16.msra.mxu0 %v588
    %816 = vmatprep.subr.bf16.mxu0 %v587
    %817 = vmatpush1.bf16.msra.mxu0 %v586
    %818 = vmatprep.subr.bf16.mxu0 %v585
    %819 = vmatpush1.bf16.msra.mxu0 %v584
    %820 = vmatprep.subr.bf16.mxu0 %v583
    %821 = vmatpush1.bf16.msra.mxu0 %v582
    %822 = vmatprep.subr.bf16.mxu0 %v613
    %823 = vmatpush2.bf16.msra.mxu0 %v612
    %824 = vmatprep.subr.bf16.mxu0 %v611
    %825 = vmatpush2.bf16.msra.mxu0 %v610
    %826 = vmatprep.subr.bf16.mxu0 %v609
    %827 = vmatpush2.bf16.msra.mxu0 %v608
    %828 = vmatprep.subr.bf16.mxu0 %v607
    %829 = vmatpush2.bf16.msra.mxu0 %v606
    %830 = vmatprep.subr.bf16.mxu0 %v605
    %831 = vmatpush2.bf16.msra.mxu0 %v604
    %832 = vmatprep.subr.bf16.mxu0 %v603
    %833 = vmatpush2.bf16.msra.mxu0 %v602
    %834 = vmatprep.subr.bf16.mxu0 %v601
    %835 = vmatpush2.bf16.msra.mxu0 %v600
    %836 = vmatprep.subr.bf16.mxu0 %v599
    %837 = vmatpush2.bf16.msra.mxu0 %v598
    %838 = vmatprep.mubr.bf16.mxu0 %v233
    %839 = vmatmul.mubr.bf16.gmra.mxu0 %v232
    %v840 = vpop.f32.mrf.mxu0
    %v841 = vadd.f32 %v203, %v840
    %v842 = vpop.f32.mrf.mxu0
    %v843 = vadd.f32 %v207, %v842
    %v844 = vpop.f32.mrf.mxu0
    %v845 = vadd.f32 %v203, %v844
    %v846 = vpop.f32.mrf.mxu0
    %v847 = vadd.f32 %v207, %v846
    %848 = vdwg.mxu0
    %849 = vmatprep.subr.bf16.mxu0 %v629
    %850 = vmatpush1.bf16.msra.mxu0 %v628
    %851 = vmatprep.subr.bf16.mxu0 %v627
    %852 = vmatpush1.bf16.msra.mxu0 %v626
    %853 = vmatprep.subr.bf16.mxu0 %v625
    %854 = vmatpush1.bf16.msra.mxu0 %v624
    %855 = vmatprep.subr.bf16.mxu0 %v623
    %856 = vmatpush1.bf16.msra.mxu0 %v622
    %857 = vmatprep.subr.bf16.mxu0 %v621
    %858 = vmatpush1.bf16.msra.mxu0 %v620
    %859 = vmatprep.subr.bf16.mxu0 %v619
    %860 = vmatpush1.bf16.msra.mxu0 %v618
    %861 = vmatprep.subr.bf16.mxu0 %v617
    %862 = vmatpush1.bf16.msra.mxu0 %v616
    %863 = vmatprep.subr.bf16.mxu0 %v615
    %864 = vmatpush1.bf16.msra.mxu0 %v614
    %865 = vmatprep.subr.bf16.mxu0 %v645
    %866 = vmatpush2.bf16.msra.mxu0 %v644
    %867 = vmatprep.subr.bf16.mxu0 %v643
    %868 = vmatpush2.bf16.msra.mxu0 %v642
    %869 = vmatprep.subr.bf16.mxu0 %v641
    %870 = vmatpush2.bf16.msra.mxu0 %v640
    %871 = vmatprep.subr.bf16.mxu0 %v639
    %872 = vmatpush2.bf16.msra.mxu0 %v638
    %873 = vmatprep.subr.bf16.mxu0 %v637
    %874 = vmatpush2.bf16.msra.mxu0 %v636
    %875 = vmatprep.subr.bf16.mxu0 %v635
    %876 = vmatpush2.bf16.msra.mxu0 %v634
    %877 = vmatprep.subr.bf16.mxu0 %v633
    %878 = vmatpush2.bf16.msra.mxu0 %v632
    %879 = vmatprep.subr.bf16.mxu0 %v631
    %880 = vmatpush2.bf16.msra.mxu0 %v630
    %881 = vmatprep.mubr.bf16.mxu0 %v235
    %882 = vmatmul.mubr.bf16.gmra.mxu0 %v234
    %v883 = vpop.f32.mrf.mxu0
    %v884 = vadd.f32 %v841, %v883
    %v885 = vpop.f32.mrf.mxu0
    %v886 = vadd.f32 %v843, %v885
    %v887 = vpop.f32.mrf.mxu0
    %v888 = vadd.f32 %v845, %v887
    %v889 = vpop.f32.mrf.mxu0
    %v890 = vadd.f32 %v847, %v889
    %891 = vdwg.mxu0
    %892 = vmatprep.subr.bf16.mxu0 %v661
    %893 = vmatpush1.bf16.msra.mxu0 %v660
    %894 = vmatprep.subr.bf16.mxu0 %v659
    %895 = vmatpush1.bf16.msra.mxu0 %v658
    %896 = vmatprep.subr.bf16.mxu0 %v657
    %897 = vmatpush1.bf16.msra.mxu0 %v656
    %898 = vmatprep.subr.bf16.mxu0 %v655
    %899 = vmatpush1.bf16.msra.mxu0 %v654
    %900 = vmatprep.subr.bf16.mxu0 %v653
    %901 = vmatpush1.bf16.msra.mxu0 %v652
    %902 = vmatprep.subr.bf16.mxu0 %v651
    %903 = vmatpush1.bf16.msra.mxu0 %v650
    %904 = vmatprep.subr.bf16.mxu0 %v649
    %905 = vmatpush1.bf16.msra.mxu0 %v648
    %906 = vmatprep.subr.bf16.mxu0 %v647
    %907 = vmatpush1.bf16.msra.mxu0 %v646
    %908 = vmatprep.subr.bf16.mxu0 %v677
    %909 = vmatpush2.bf16.msra.mxu0 %v676
    %910 = vmatprep.subr.bf16.mxu0 %v675
    %911 = vmatpush2.bf16.msra.mxu0 %v674
    %912 = vmatprep.subr.bf16.mxu0 %v673
    %913 = vmatpush2.bf16.msra.mxu0 %v672
    %914 = vmatprep.subr.bf16.mxu0 %v671
    %915 = vmatpush2.bf16.msra.mxu0 %v670
    %916 = vmatprep.subr.bf16.mxu0 %v669
    %917 = vmatpush2.bf16.msra.mxu0 %v668
    %918 = vmatprep.subr.bf16.mxu0 %v667
    %919 = vmatpush2.bf16.msra.mxu0 %v666
    %920 = vmatprep.subr.bf16.mxu0 %v665
    %921 = vmatpush2.bf16.msra.mxu0 %v664
    %922 = vmatprep.subr.bf16.mxu0 %v663
    %923 = vmatpush2.bf16.msra.mxu0 %v662
    %924 = vmatprep.mubr.bf16.mxu0 %v237
    %925 = vmatmul.mubr.bf16.gmra.mxu0 %v236
    %v926 = vpop.f32.mrf.mxu0
    %v927 = vadd.f32 %v884, %v926
    %v928 = vpop.f32.mrf.mxu0
    %v929 = vadd.f32 %v886, %v928
    %v930 = vpop.f32.mrf.mxu0
    %v931 = vadd.f32 %v888, %v930
    %v932 = vpop.f32.mrf.mxu0
    %v933 = vadd.f32 %v890, %v932
    %934 = vdwg.mxu0
    %935 = vmatprep.subr.bf16.mxu0 %v693
    %936 = vmatpush1.bf16.msra.mxu0 %v692
    %937 = vmatprep.subr.bf16.mxu0 %v691
    %938 = vmatpush1.bf16.msra.mxu0 %v690
    %939 = vmatprep.subr.bf16.mxu0 %v689
    %940 = vmatpush1.bf16.msra.mxu0 %v688
    %941 = vmatprep.subr.bf16.mxu0 %v687
    %942 = vmatpush1.bf16.msra.mxu0 %v686
    %943 = vmatprep.subr.bf16.mxu0 %v685
    %944 = vmatpush1.bf16.msra.mxu0 %v684
    %945 = vmatprep.subr.bf16.mxu0 %v683
    %946 = vmatpush1.bf16.msra.mxu0 %v682
    %947 = vmatprep.subr.bf16.mxu0 %v681
    %948 = vmatpush1.bf16.msra.mxu0 %v680
    %949 = vmatprep.subr.bf16.mxu0 %v679
    %950 = vmatpush1.bf16.msra.mxu0 %v678
    %951 = vmatprep.subr.bf16.mxu0 0
    %952 = vmatpush2.bf16.msra.mxu0 0
    %953 = vmatprep.subr.bf16.mxu0 0
    %954 = vmatpush2.bf16.msra.mxu0 0
    %955 = vmatprep.subr.bf16.mxu0 0
    %956 = vmatpush2.bf16.msra.mxu0 0
    %957 = vmatprep.subr.bf16.mxu0 0
    %958 = vmatpush2.bf16.msra.mxu0 0
    %959 = vmatprep.subr.bf16.mxu0 0
    %960 = vmatpush2.bf16.msra.mxu0 0
    %961 = vmatprep.subr.bf16.mxu0 0
    %962 = vmatpush2.bf16.msra.mxu0 0
    %963 = vmatprep.subr.bf16.mxu0 0
    %964 = vmatpush2.bf16.msra.mxu0 0
    %965 = vmatprep.subr.bf16.mxu0 0
    %966 = vmatpush2.bf16.msra.mxu0 0
    %967 = vmatprep.mubr.bf16.mxu0 0
    %968 = vmatmul.mubr.bf16.gmra.mxu0 %v238
    %v969 = vpop.f32.mrf.mxu0
    %v970 = vadd.f32 %v927, %v969
    %v971 = vpop.f32.mrf.mxu0
    %v972 = vadd.f32 %v929, %v971
    %v973 = vpop.f32.mrf.mxu0
    %v974 = vadd.f32 %v931, %v973
    %v975 = vpop.f32.mrf.mxu0
    %v976 = vadd.f32 %v933, %v975
    %977 = vdwg.mxu0
    %v978 = vmax.f32 %v970, 0.0
    %v979 = vmax.f32 %v972, 0.0
    %v980 = vmax.f32 %v974, 0.0
    %v981 = vmax.f32 %v976, 0.0
    %v982 = vpack.c.bf16 %v980, %v978
    %v983 = vpack.c.bf16 %v981, %v979
    %v984 = vld [vmem:[%s4] sm:$0xf]
    %v985 = vld [vmem:[%s4 + $0x4] sm:$0xf]
    %v986 = vld [vmem:[%s4 + $0x8] sm:$0xf]
    %v987 = vld [vmem:[%s4 + $0xc] sm:$0xf]
    %v988 = vld [vmem:[%s4 + $0x10] sm:$0xf]
    %v989 = vld [vmem:[%s4 + $0x14] sm:$0xf]
    %v990 = vld [vmem:[%s4 + $0x18] sm:$0xf]
    %v991 = vld [vmem:[%s4 + $0x1c] sm:$0xf]
    %v992 = vld [vmem:[%s4 + $0x20] sm:$0xf]
    %v993 = vld [vmem:[%s4 + $0x24] sm:$0xf]
    %v994 = vld [vmem:[%s4 + $0x28] sm:$0xf]
    %v995 = vld [vmem:[%s4 + $0x2c] sm:$0xf]
    %v996 = vld [vmem:[%s4 + $0x30] sm:$0xf]
    %v997 = vld [vmem:[%s4 + $0x34] sm:$0xf]
    %v998 = vld [vmem:[%s4 + $0x38] sm:$0xf]
    %v999 = vld [vmem:[%s4 + $0x3c] sm:$0xf]
    %v1000 = vld [vmem:[%s4 + $0x40] sm:$0xf]
    %v1001 = vld [vmem:[%s4 + $0x44] sm:$0xf]
    %v1002 = vld [vmem:[%s4 + $0x48] sm:$0xf]
    %v1003 = vld [vmem:[%s4 + $0x4c] sm:$0xf]
    %v1004 = vld [vmem:[%s4 + $0x50] sm:$0xf]
    %v1005 = vld [vmem:[%s4 + $0x54] sm:$0xf]
    %v1006 = vld [vmem:[%s4 + $0x58] sm:$0xf]
    %v1007 = vld [vmem:[%s4 + $0x5c] sm:$0xf]
    %v1008 = vld [vmem:[%s4 + $0x60] sm:$0xf]
    %v1009 = vld [vmem:[%s4 + $0x64] sm:$0xf]
    %v1010 = vld [vmem:[%s4 + $0x68] sm:$0xf]
    %v1011 = vld [vmem:[%s4 + $0x6c] sm:$0xf]
    %v1012 = vld [vmem:[%s4 + $0x70] sm:$0xf]
    %v1013 = vld [vmem:[%s4 + $0x74] sm:$0xf]
    %v1014 = vld [vmem:[%s4 + $0x78] sm:$0xf]
    %v1015 = vld [vmem:[%s4 + $0x7c] sm:$0xf]
    %v1016 = vld [vmem:[%s5] sm:$0x1]
    %v1018 = vlaneseq
    %v1019 = vshrl.u32 %v1018, 7
    %v1020 = vsub.s32 0, %v1019
    %v1021 = vrot.slane %v1016, %v1020
    %v1055 = vunpack.c.l.b16 %v984
    %v1056 = vunpack.c.l.b16 %v985
    %v1057 = vunpack.c.l.b16 %v986
    %v1058 = vunpack.c.l.b16 %v987
    %v1059 = vunpack.c.l.b16 %v988
    %v1060 = vunpack.c.l.b16 %v989
    %v1061 = vunpack.c.l.b16 %v990
    %v1062 = vunpack.c.l.b16 %v991
    %v1063 = vunpack.c.l.b16 %v992
    %v1064 = vunpack.c.l.b16 %v993
    %v1065 = vunpack.c.l.b16 %v994
    %v1066 = vunpack.c.l.b16 %v995
    %v1067 = vunpack.c.l.b16 %v996
    %v1068 = vunpack.c.l.b16 %v997
    %v1069 = vunpack.c.l.b16 %v998
    %v1070 = vunpack.c.l.b16 %v999
    %v1071 = vunpack.c.l.b16 %v1000
    %v1072 = vunpack.c.l.b16 %v1001
    %v1073 = vunpack.c.l.b16 %v1002
    %v1074 = vunpack.c.l.b16 %v1003
    %v1075 = vunpack.c.l.b16 %v1004
    %v1076 = vunpack.c.l.b16 %v1005
    %v1077 = vunpack.c.l.b16 %v1006
    %v1078 = vunpack.c.l.b16 %v1007
    %v1079 = vunpack.c.l.b16 %v1008
    %v1080 = vunpack.c.l.b16 %v1009
    %v1081 = vunpack.c.l.b16 %v1010
    %v1082 = vunpack.c.l.b16 %v1011
    %v1083 = vunpack.c.l.b16 %v1012
    %v1084 = vunpack.c.l.b16 %v1013
    %v1085 = vunpack.c.l.b16 %v1014
    %v1086 = vunpack.c.l.b16 %v1015
    %v1087 = vpack.c.b16 %v1056, %v1055
    %v1088 = vpack.c.b16 %v1058, %v1057
    %v1089 = vpack.c.b16 %v1060, %v1059
    %v1090 = vpack.c.b16 %v1062, %v1061
    %v1091 = vpack.c.b16 %v1064, %v1063
    %v1092 = vpack.c.b16 %v1066, %v1065
    %v1093 = vpack.c.b16 %v1068, %v1067
    %v1094 = vpack.c.b16 %v1070, %v1069
    %v1095 = vpack.c.b16 %v1072, %v1071
    %v1096 = vpack.c.b16 %v1074, %v1073
    %v1097 = vpack.c.b16 %v1076, %v1075
    %v1098 = vpack.c.b16 %v1078, %v1077
    %v1099 = vpack.c.b16 %v1080, %v1079
    %v1100 = vpack.c.b16 %v1082, %v1081
    %v1101 = vpack.c.b16 %v1084, %v1083
    %v1102 = vpack.c.b16 %v1086, %v1085
    %1119 = vmatprep.subr.bf16.mxu0 0
    %1120 = vmatpush1.bf16.msra.mxu0 %v1094
    %1121 = vmatprep.subr.bf16.mxu0 0
    %1122 = vmatpush1.bf16.msra.mxu0 %v1093
    %1123 = vmatprep.subr.bf16.mxu0 0
    %1124 = vmatpush1.bf16.msra.mxu0 %v1092
    %1125 = vmatprep.subr.bf16.mxu0 0
    %1126 = vmatpush1.bf16.msra.mxu0 %v1091
    %1127 = vmatprep.subr.bf16.mxu0 0
    %1128 = vmatpush1.bf16.msra.mxu0 %v1090
    %1129 = vmatprep.subr.bf16.mxu0 0
    %1130 = vmatpush1.bf16.msra.mxu0 %v1089
    %1131 = vmatprep.subr.bf16.mxu0 0
    %1132 = vmatpush1.bf16.msra.mxu0 %v1088
    %1133 = vmatprep.subr.bf16.mxu0 0
    %1134 = vmatpush1.bf16.msra.mxu0 %v1087
    %1135 = vmatprep.subr.bf16.mxu0 0
    %1136 = vmatpush2.bf16.msra.mxu0 %v1102
    %1137 = vmatprep.subr.bf16.mxu0 0
    %1138 = vmatpush2.bf16.msra.mxu0 %v1101
    %1139 = vmatprep.subr.bf16.mxu0 0
    %1140 = vmatpush2.bf16.msra.mxu0 %v1100
    %1141 = vmatprep.subr.bf16.mxu0 0
    %1142 = vmatpush2.bf16.msra.mxu0 %v1099
    %1143 = vmatprep.subr.bf16.mxu0 0
    %1144 = vmatpush2.bf16.msra.mxu0 %v1098
    %1145 = vmatprep.subr.bf16.mxu0 0
    %1146 = vmatpush2.bf16.msra.mxu0 %v1097
    %1147 = vmatprep.subr.bf16.mxu0 0
    %1148 = vmatpush2.bf16.msra.mxu0 %v1096
    %1149 = vmatprep.subr.bf16.mxu0 0
    %1150 = vmatpush2.bf16.msra.mxu0 %v1095
    %1151 = vmatprep.mubr.bf16.mxu0 %v983
    %1152 = vmatmul.mubr.bf16.gmra.mxu0 %v982
    %v1153 = vpop.f32.mrf.mxu0
    %v1154 = vadd.f32 %v1021, %v1153
    %v1155 = vpop.f32.mrf.mxu0
    %v1156 = vpop.f32.mrf.mxu0
    %v1157 = vadd.f32 %v1021, %v1156
    %v1158 = vpop.f32.mrf.mxu0
    %1159 = vdwg.mxu0
    %v1160 = vmax.f32 %v1154, 0.0
    %v1161 = vmax.f32 %v1157, 0.0
    %v1162 = vpack.c.bf16 %v1161, %v1160
    %v1163 = vld [vmem:[%s6] sm:$0xf]
    %v1164 = vld [vmem:[%s6 + $0x4] sm:$0xf]
    %v1165 = vld [vmem:[%s6 + $0x8] sm:$0xf]
    %v1166 = vld [vmem:[%s6 + $0xc] sm:$0xf]
    %v1167 = vld [vmem:[%s6 + $0x10] sm:$0xf]
    %v1168 = vld [vmem:[%s6 + $0x14] sm:$0xf]
    %v1169 = vld [vmem:[%s6 + $0x18] sm:$0xf]
    %v1170 = vld [vmem:[%s6 + $0x1c] sm:$0xf]
    %v1171 = vld [vmem:[%s6 + $0x20] sm:$0xf]
    %v1172 = vld [vmem:[%s6 + $0x24] sm:$0xf]
    %v1173 = vld [vmem:[%s6 + $0x28] sm:$0xf]
    %v1174 = vld [vmem:[%s6 + $0x2c] sm:$0xf]
    %v1175 = vld [vmem:[%s6 + $0x30] sm:$0xf]
    %v1176 = vld [vmem:[%s6 + $0x34] sm:$0xf]
    %v1177 = vld [vmem:[%s6 + $0x38] sm:$0xf]
    %v1178 = vld [vmem:[%s6 + $0x3c] sm:$0xf]
    %v1179 = vld [vmem:[%s7] sm:$0x1]
    %v1181 = vlaneseq
    %v1182 = vshrl.u32 %v1181, 7
    %v1183 = vsub.s32 0, %v1182
    %v1184 = vrot.slane %v1179, %v1183
    %v1202 = vunpack.c.l.b16 %v1163
    %v1203 = vunpack.c.l.b16 %v1164
    %v1204 = vunpack.c.l.b16 %v1165
    %v1205 = vunpack.c.l.b16 %v1166
    %v1206 = vunpack.c.l.b16 %v1167
    %v1207 = vunpack.c.l.b16 %v1168
    %v1208 = vunpack.c.l.b16 %v1169
    %v1209 = vunpack.c.l.b16 %v1170
    %v1210 = vunpack.c.l.b16 %v1171
    %v1211 = vunpack.c.l.b16 %v1172
    %v1212 = vunpack.c.l.b16 %v1173
    %v1213 = vunpack.c.l.b16 %v1174
    %v1214 = vunpack.c.l.b16 %v1175
    %v1215 = vunpack.c.l.b16 %v1176
    %v1216 = vunpack.c.l.b16 %v1177
    %v1217 = vunpack.c.l.b16 %v1178
    %v1218 = vpack.c.b16 %v1203, %v1202
    %v1219 = vpack.c.b16 %v1205, %v1204
    %v1220 = vpack.c.b16 %v1207, %v1206
    %v1221 = vpack.c.b16 %v1209, %v1208
    %v1222 = vpack.c.b16 %v1211, %v1210
    %v1223 = vpack.c.b16 %v1213, %v1212
    %v1224 = vpack.c.b16 %v1215, %v1214
    %v1225 = vpack.c.b16 %v1217, %v1216
    %1234 = vmatprep.subr.bf16.mxu0 0
    %1235 = vmatpush1.bf16.msra.mxu0 %v1225
    %1236 = vmatprep.subr.bf16.mxu0 0
    %1237 = vmatpush1.bf16.msra.mxu0 %v1224
    %1238 = vmatprep.subr.bf16.mxu0 0
    %1239 = vmatpush1.bf16.msra.mxu0 %v1223
    %1240 = vmatprep.subr.bf16.mxu0 0
    %1241 = vmatpush1.bf16.msra.mxu0 %v1222
    %1242 = vmatprep.subr.bf16.mxu0 0
    %1243 = vmatpush1.bf16.msra.mxu0 %v1221
    %1244 = vmatprep.subr.bf16.mxu0 0
    %1245 = vmatpush1.bf16.msra.mxu0 %v1220
    %1246 = vmatprep.subr.bf16.mxu0 0
    %1247 = vmatpush1.bf16.msra.mxu0 %v1219
    %1248 = vmatprep.subr.bf16.mxu0 0
    %1249 = vmatpush1.bf16.msra.mxu0 %v1218
    %1250 = vmatprep.subr.bf16.mxu0 0
    %1251 = vmatpush2.bf16.msra.mxu0 0
    %1252 = vmatprep.subr.bf16.mxu0 0
    %1253 = vmatpush2.bf16.msra.mxu0 0
    %1254 = vmatprep.subr.bf16.mxu0 0
    %1255 = vmatpush2.bf16.msra.mxu0 0
    %1256 = vmatprep.subr.bf16.mxu0 0
    %1257 = vmatpush2.bf16.msra.mxu0 0
    %1258 = vmatprep.subr.bf16.mxu0 0
    %1259 = vmatpush2.bf16.msra.mxu0 0
    %1260 = vmatprep.subr.bf16.mxu0 0
    %1261 = vmatpush2.bf16.msra.mxu0 0
    %1262 = vmatprep.subr.bf16.mxu0 0
    %1263 = vmatpush2.bf16.msra.mxu0 0
    %1264 = vmatprep.subr.bf16.mxu0 0
    %1265 = vmatpush2.bf16.msra.mxu0 0
    %1266 = vmatprep.mubr.bf16.mxu0 0
    %1267 = vmatmul.mubr.bf16.gmra.mxu0 %v1162
    %v1268 = vpop.f32.mrf.mxu0
    %v1269 = vadd.f32 %v1184, %v1268
    %v1270 = vpop.f32.mrf.mxu0
    %v1271 = vpop.f32.mrf.mxu0
    %v1272 = vadd.f32 %v1184, %v1271
    %v1273 = vpop.f32.mrf.mxu0
    %1274 = vdwg.mxu0
    %v1275 = vmul.f32 %v1269, 0.5
    %v1276 = vmul.f32 %v1272, 0.5
    %v1277 = vmul.f32 %v1275, 1.442695
    %v1278 = vpow.pop %v1277
    %v1279 = vmul.f32 %v1276, 1.442695
    %v1280 = vpow.pop %v1279
    %v1281 = vld [vmem:[%s1] sm:$0xff]
    %v1282 = vld [vmem:[%s1 + $0x8] sm:$0xff]
    %1285 = vrot.lane.b32.xlu0 %v1281, 2
    %v1286 = vpop.permute.xlu0 %1285
    %1287 = vrot.lane.b32.xlu0 %v1282, 2
    %v1288 = vpop.permute.xlu0 %1287
    %v1291 = vmul.f32 %v1278, %v1286
    %v1292 = vmul.f32 %v1280, %v1288
    %1295 = vrot.lane.b32.xlu0 %v1291, 126
    %v1296 = vpop.permute.xlu0 %1295
    %1297 = vrot.lane.b32.xlu0 %v1292, 126
    %v1298 = vpop.permute.xlu0 %1297
    %v1301 = vadd.f32 %v1269, %v1296
    %v1302 = vadd.f32 %v1272, %v1298
    %v1303 = vld [vmem:[%s8] sm:$0x3]
    %v1304 = vld [vmem:[%s9] sm:$0x1]
    %1306 = vset.pattern.permute.xlu0 0
    %1307 = vperm.xlu0 %1306, %v1301
    %v1308 = vpop.permute.xlu0 %1307
    %1311 = vset.pattern.permute.xlu0 0
    %1312 = vperm.xlu0 %1311, %v1302
    %v1313 = vpop.permute.xlu0 %1312
    %v1315 = vlaneseq
    %v1316 = vshrl.u32 %v1315, 7
    %v1317 = vsub.s32 0, %v1316
    %v1318 = vrot.slane %v1303, %v1317
    %v1319 = vmul.f32 %v1308, %v1318
    %v1320 = vmul.f32 %v1313, %v1318
    %v1322 = vlaneseq
    %v1323 = vshrl.u32 %v1322, 7
    %v1324 = vsub.s32 0, %v1323
    %v1325 = vrot.slane %v1304, %v1324
    %v1327 = vadd.f32 %v1325, %v1319
    %v1328 = vadd.f32 %v1325, %v1320
    %1329 = vset.pattern.permute.xlu0 1
    %1330 = vperm.xlu0 %1329, %v1301
    %v1331 = vpop.permute.xlu0 %1330
    %1333 = vset.pattern.permute.xlu0 1
    %1334 = vperm.xlu0 %1333, %v1302
    %v1335 = vpop.permute.xlu0 %1334
    %v1337 = vlaneseq
    %v1338 = vshrl.u32 %v1337, 7
    %v1339 = vsub.s32 1, %v1338
    %v1340 = vrot.slane %v1303, %v1339
    %v1341 = vmul.f32 %v1331, %v1340
    %v1342 = vmul.f32 %v1335, %v1340
    %v1343 = vadd.f32 %v1327, %v1341
    %v1344 = vadd.f32 %v1328, %v1342
    %v1345 = vmax.f32 %v1343, 0.0
    %v1346 = vmax.f32 %v1344, 0.0
    %v1347 = vpack.c.bf16 %v1346, %v1345
    %v1348 = vld [vmem:[%s10] sm:$0xff]
    %v1349 = vld [vmem:[%s10 + $0x8] sm:$0xff]
    %v1350 = vld [vmem:[%s10 + $0x10] sm:$0xff]
    %v1351 = vld [vmem:[%s10 + $0x18] sm:$0xff]
    %v1352 = vld [vmem:[%s10 + $0x20] sm:$0xff]
    %v1353 = vld [vmem:[%s10 + $0x28] sm:$0xff]
    %v1354 = vld [vmem:[%s10 + $0x30] sm:$0xff]
    %v1355 = vld [vmem:[%s10 + $0x38] sm:$0xff]
    %v1356 = vld [vmem:[%s10 + $0x40] sm:$0xff]
    %v1357 = vld [vmem:[%s10 + $0x48] sm:$0xff]
    %v1358 = vld [vmem:[%s10 + $0x50] sm:$0xff]
    %v1359 = vld [vmem:[%s10 + $0x58] sm:$0xff]
    %v1360 = vld [vmem:[%s10 + $0x60] sm:$0xff]
    %v1361 = vld [vmem:[%s10 + $0x68] sm:$0xff]
    %v1362 = vld [vmem:[%s10 + $0x70] sm:$0xff]
    %v1363 = vld [vmem:[%s10 + $0x78] sm:$0xff]
    %v1364 = vld [vmem:[%s11] sm:$0x3]
    %v1366 = vlaneseq
    %v1367 = vshrl.u32 %v1366, 7
    %v1368 = vsub.s32 0, %v1367
    %v1369 = vrot.slane %v1364, %v1368
    %v1370 = vlaneseq
    %v1371 = vshrl.u32 %v1370, 7
    %v1372 = vsub.s32 1, %v1371
    %v1373 = vrot.slane %v1364, %v1372
    %v1392 = vunpack.c.l.b16 %v1348
    %v1393 = vunpack.c.h.b16 %v1348
    %v1394 = vunpack.c.l.b16 %v1349
    %v1395 = vunpack.c.h.b16 %v1349
    %v1396 = vunpack.c.l.b16 %v1350
    %v1397 = vunpack.c.h.b16 %v1350
    %v1398 = vunpack.c.l.b16 %v1351
    %v1399 = vunpack.c.h.b16 %v1351
    %v1400 = vunpack.c.l.b16 %v1352
    %v1401 = vunpack.c.h.b16 %v1352
    %v1402 = vunpack.c.l.b16 %v1353
    %v1403 = vunpack.c.h.b16 %v1353
    %v1404 = vunpack.c.l.b16 %v1354
    %v1405 = vunpack.c.h.b16 %v1354
    %v1406 = vunpack.c.l.b16 %v1355
    %v1407 = vunpack.c.h.b16 %v1355
    %v1408 = vunpack.c.l.b16 %v1356
    %v1409 = vunpack.c.h.b16 %v1356
    %v1410 = vunpack.c.l.b16 %v1357
    %v1411 = vunpack.c.h.b16 %v1357
    %v1412 = vunpack.c.l.b16 %v1358
    %v1413 = vunpack.c.h.b16 %v1358
    %v1414 = vunpack.c.l.b16 %v1359
    %v1415 = vunpack.c.h.b16 %v1359
    %v1416 = vunpack.c.l.b16 %v1360
    %v1417 = vunpack.c.h.b16 %v1360
    %v1418 = vunpack.c.l.b16 %v1361
    %v1419 = vunpack.c.h.b16 %v1361
    %v1420 = vunpack.c.l.b16 %v1362
    %v1421 = vunpack.c.h.b16 %v1362
    %v1422 = vunpack.c.l.b16 %v1363
    %v1423 = vunpack.c.h.b16 %v1363
    %v1424 = vpack.c.b16 %v1394, %v1392
    %v1425 = vpack.c.b16 %v1395, %v1393
    %v1426 = vpack.c.b16 %v1398, %v1396
    %v1427 = vpack.c.b16 %v1399, %v1397
    %v1428 = vpack.c.b16 %v1402, %v1400
    %v1429 = vpack.c.b16 %v1403, %v1401
    %v1430 = vpack.c.b16 %v1406, %v1404
    %v1431 = vpack.c.b16 %v1407, %v1405
    %v1432 = vpack.c.b16 %v1410, %v1408
    %v1433 = vpack.c.b16 %v1411, %v1409
    %v1434 = vpack.c.b16 %v1414, %v1412
    %v1435 = vpack.c.b16 %v1415, %v1413
    %v1436 = vpack.c.b16 %v1418, %v1416
    %v1437 = vpack.c.b16 %v1419, %v1417
    %v1438 = vpack.c.b16 %v1422, %v1420
    %v1439 = vpack.c.b16 %v1423, %v1421
    %1456 = vmatprep.subr.bf16.mxu0 %v1439
    %1457 = vmatpush1.bf16.msra.mxu0 %v1438
    %1458 = vmatprep.subr.bf16.mxu0 %v1437
    %1459 = vmatpush1.bf16.msra.mxu0 %v1436
    %1460 = vmatprep.subr.bf16.mxu0 %v1435
    %1461 = vmatpush1.bf16.msra.mxu0 %v1434
    %1462 = vmatprep.subr.bf16.mxu0 %v1433
    %1463 = vmatpush1.bf16.msra.mxu0 %v1432
    %1464 = vmatprep.subr.bf16.mxu0 %v1431
    %1465 = vmatpush1.bf16.msra.mxu0 %v1430
    %1466 = vmatprep.subr.bf16.mxu0 %v1429
    %1467 = vmatpush1.bf16.msra.mxu0 %v1428
    %1468 = vmatprep.subr.bf16.mxu0 %v1427
    %1469 = vmatpush1.bf16.msra.mxu0 %v1426
    %1470 = vmatprep.subr.bf16.mxu0 %v1425
    %1471 = vmatpush1.bf16.msra.mxu0 %v1424
    %1472 = vmatprep.subr.bf16.mxu0 0
    %1473 = vmatpush2.bf16.msra.mxu0 0
    %1474 = vmatprep.subr.bf16.mxu0 0
    %1475 = vmatpush2.bf16.msra.mxu0 0
    %1476 = vmatprep.subr.bf16.mxu0 0
    %1477 = vmatpush2.bf16.msra.mxu0 0
    %1478 = vmatprep.subr.bf16.mxu0 0
    %1479 = vmatpush2.bf16.msra.mxu0 0
    %1480 = vmatprep.subr.bf16.mxu0 0
    %1481 = vmatpush2.bf16.msra.mxu0 0
    %1482 = vmatprep.subr.bf16.mxu0 0
    %1483 = vmatpush2.bf16.msra.mxu0 0
    %1484 = vmatprep.subr.bf16.mxu0 0
    %1485 = vmatpush2.bf16.msra.mxu0 0
    %1486 = vmatprep.subr.bf16.mxu0 0
    %1487 = vmatpush2.bf16.msra.mxu0 0
    %1488 = vmatprep.mubr.bf16.mxu0 0
    %1489 = vmatmul.mubr.bf16.gmra.mxu0 %v1347
    %v1490 = vpop.f32.mrf.mxu0
    %v1491 = vadd.f32 %v1369, %v1490
    %v1492 = vpop.f32.mrf.mxu0
    %v1493 = vadd.f32 %v1373, %v1492
    %v1494 = vpop.f32.mrf.mxu0
    %v1495 = vadd.f32 %v1369, %v1494
    %v1496 = vpop.f32.mrf.mxu0
    %v1497 = vadd.f32 %v1373, %v1496
    %1498 = vdwg.mxu0
    %v1499 = vmax.f32 %v1491, 0.0
    %v1500 = vmax.f32 %v1493, 0.0
    %v1501 = vmax.f32 %v1495, 0.0
    %v1502 = vmax.f32 %v1497, 0.0
    %v1503 = vpack.c.bf16 %v1501, %v1499
    %v1504 = vpack.c.bf16 %v1502, %v1500
    %v1505 = vld [vmem:[#allocation4] sm:$0xff]
    %v1506 = vld [vmem:[#allocation4 + $0x8] sm:$0xff]
    %v1507 = vld [vmem:[#allocation4 + $0x10] sm:$0xff]
    %v1508 = vld [vmem:[#allocation4 + $0x18] sm:$0xf]
    %v1509 = vld [vmem:[#allocation4 + $0x1c] sm:$0xff]
    %v1510 = vld [vmem:[#allocation4 + $0x24] sm:$0xff]
    %v1511 = vld [vmem:[#allocation4 + $0x2c] sm:$0xff]
    %v1512 = vld [vmem:[#allocation4 + $0x34] sm:$0xf]
    %v1513 = vld [vmem:[#allocation4 + $0x38] sm:$0xff]
    %v1514 = vld [vmem:[#allocation4 + $0x40] sm:$0xff]
    %v1515 = vld [vmem:[#allocation4 + $0x48] sm:$0xff]
    %v1516 = vld [vmem:[#allocation4 + $0x50] sm:$0xf]
    %v1517 = vld [vmem:[#allocation4 + $0x54] sm:$0xff]
    %v1518 = vld [vmem:[#allocation4 + $0x5c] sm:$0xff]
    %v1519 = vld [vmem:[#allocation4 + $0x64] sm:$0xff]
    %v1520 = vld [vmem:[#allocation4 + $0x6c] sm:$0xf]
    %v1521 = vld [vmem:[#allocation4 + $0x70] sm:$0xff]
    %v1522 = vld [vmem:[#allocation4 + $0x78] sm:$0xff]
    %v1523 = vld [vmem:[#allocation4 + $0x80] sm:$0xff]
    %v1524 = vld [vmem:[#allocation4 + $0x88] sm:$0xf]
    %v1525 = vld [vmem:[#allocation4 + $0x8c] sm:$0xff]
    %v1526 = vld [vmem:[#allocation4 + $0x94] sm:$0xff]
    %v1527 = vld [vmem:[#allocation4 + $0x9c] sm:$0xff]
    %v1528 = vld [vmem:[#allocation4 + $0xa4] sm:$0xf]
    %v1529 = vld [vmem:[#allocation4 + $0xa8] sm:$0xff]
    %v1530 = vld [vmem:[#allocation4 + $0xb0] sm:$0xff]
    %v1531 = vld [vmem:[#allocation4 + $0xb8] sm:$0xff]
    %v1532 = vld [vmem:[#allocation4 + $0xc0] sm:$0xf]
    %v1533 = vld [vmem:[#allocation4 + $0xc4] sm:$0xff]
    %v1534 = vld [vmem:[#allocation4 + $0xcc] sm:$0xff]
    %v1535 = vld [vmem:[#allocation4 + $0xd4] sm:$0xff]
    %v1536 = vld [vmem:[#allocation4 + $0xdc] sm:$0xf]
    %v1537 = vld [vmem:[#allocation4 + $0xe0] sm:$0xff]
    %v1538 = vld [vmem:[#allocation4 + $0xe8] sm:$0xff]
    %v1539 = vld [vmem:[#allocation4 + $0xf0] sm:$0xff]
    %v1540 = vld [vmem:[#allocation4 + $0xf8] sm:$0xf]
    %v1541 = vld [vmem:[#allocation4 + $0xfc] sm:$0xff]
    %v1542 = vld [vmem:[#allocation4 + $0x104] sm:$0xff]
    %v1543 = vld [vmem:[#allocation4 + $0x10c] sm:$0xff]
    %v1544 = vld [vmem:[#allocation4 + $0x114] sm:$0xf]
    %v1545 = vld [vmem:[#allocation4 + $0x118] sm:$0xff]
    %v1546 = vld [vmem:[#allocation4 + $0x120] sm:$0xff]
    %v1547 = vld [vmem:[#allocation4 + $0x128] sm:$0xff]
    %v1548 = vld [vmem:[#allocation4 + $0x130] sm:$0xf]
    %v1549 = vld [vmem:[#allocation4 + $0x134] sm:$0xff]
    %v1550 = vld [vmem:[#allocation4 + $0x13c] sm:$0xff]
    %v1551 = vld [vmem:[#allocation4 + $0x144] sm:$0xff]
    %v1552 = vld [vmem:[#allocation4 + $0x14c] sm:$0xf]
    %v1553 = vld [vmem:[#allocation4 + $0x150] sm:$0xff]
    %v1554 = vld [vmem:[#allocation4 + $0x158] sm:$0xff]
    %v1555 = vld [vmem:[#allocation4 + $0x160] sm:$0xff]
    %v1556 = vld [vmem:[#allocation4 + $0x168] sm:$0xf]
    %v1557 = vld [vmem:[#allocation4 + $0x16c] sm:$0xff]
    %v1558 = vld [vmem:[#allocation4 + $0x174] sm:$0xff]
    %v1559 = vld [vmem:[#allocation4 + $0x17c] sm:$0xff]
    %v1560 = vld [vmem:[#allocation4 + $0x184] sm:$0xf]
    %v1561 = vld [vmem:[#allocation4 + $0x188] sm:$0xff]
    %v1562 = vld [vmem:[#allocation4 + $0x190] sm:$0xff]
    %v1563 = vld [vmem:[#allocation4 + $0x198] sm:$0xff]
    %v1564 = vld [vmem:[#allocation4 + $0x1a0] sm:$0xf]
    %v1565 = vld [vmem:[#allocation4 + $0x1a4] sm:$0xff]
    %v1566 = vld [vmem:[#allocation4 + $0x1ac] sm:$0xff]
    %v1567 = vld [vmem:[#allocation4 + $0x1b4] sm:$0xff]
    %v1568 = vld [vmem:[#allocation4 + $0x1bc] sm:$0xf]
    %v1569 = vld [vmem:[#allocation4 + $0x1c0] sm:$0xff]
    %v1570 = vld [vmem:[#allocation4 + $0x1c8] sm:$0xff]
    %v1571 = vld [vmem:[#allocation4 + $0x1d0] sm:$0xff]
    %v1572 = vld [vmem:[#allocation4 + $0x1d8] sm:$0xf]
    %v1573 = vld [vmem:[#allocation4 + $0x1dc] sm:$0xff]
    %v1574 = vld [vmem:[#allocation4 + $0x1e4] sm:$0xff]
    %v1575 = vld [vmem:[#allocation4 + $0x1ec] sm:$0xff]
    %v1576 = vld [vmem:[#allocation4 + $0x1f4] sm:$0xf]
    %v1577 = vld [vmem:[#allocation4 + $0x1f8] sm:$0xff]
    %v1578 = vld [vmem:[#allocation4 + $0x200] sm:$0xff]
    %v1579 = vld [vmem:[#allocation4 + $0x208] sm:$0xff]
    %v1580 = vld [vmem:[#allocation4 + $0x210] sm:$0xf]
    %v1581 = vld [vmem:[#allocation4 + $0x214] sm:$0xff]
    %v1582 = vld [vmem:[#allocation4 + $0x21c] sm:$0xff]
    %v1583 = vld [vmem:[#allocation4 + $0x224] sm:$0xff]
    %v1584 = vld [vmem:[#allocation4 + $0x22c] sm:$0xf]
    %v1585 = vld [vmem:[#allocation4 + $0x230] sm:$0xff]
    %v1586 = vld [vmem:[#allocation4 + $0x238] sm:$0xff]
    %v1587 = vld [vmem:[#allocation4 + $0x240] sm:$0xff]
    %v1588 = vld [vmem:[#allocation4 + $0x248] sm:$0xf]
    %v1589 = vld [vmem:[#allocation4 + $0x24c] sm:$0xff]
    %v1590 = vld [vmem:[#allocation4 + $0x254] sm:$0xff]
    %v1591 = vld [vmem:[#allocation4 + $0x25c] sm:$0xff]
    %v1592 = vld [vmem:[#allocation4 + $0x264] sm:$0xf]
    %v1593 = vld [vmem:[#allocation4 + $0x268] sm:$0xff]
    %v1594 = vld [vmem:[#allocation4 + $0x270] sm:$0xff]
    %v1595 = vld [vmem:[#allocation4 + $0x278] sm:$0xff]
    %v1596 = vld [vmem:[#allocation4 + $0x280] sm:$0xf]
    %v1597 = vld [vmem:[#allocation4 + $0x284] sm:$0xff]
    %v1598 = vld [vmem:[#allocation4 + $0x28c] sm:$0xff]
    %v1599 = vld [vmem:[#allocation4 + $0x294] sm:$0xff]
    %v1600 = vld [vmem:[#allocation4 + $0x29c] sm:$0xf]
    %v1601 = vld [vmem:[#allocation4 + $0x2a0] sm:$0xff]
    %v1602 = vld [vmem:[#allocation4 + $0x2a8] sm:$0xff]
    %v1603 = vld [vmem:[#allocation4 + $0x2b0] sm:$0xff]
    %v1604 = vld [vmem:[#allocation4 + $0x2b8] sm:$0xf]
    %v1605 = vld [vmem:[#allocation4 + $0x2bc] sm:$0xff]
    %v1606 = vld [vmem:[#allocation4 + $0x2c4] sm:$0xff]
    %v1607 = vld [vmem:[#allocation4 + $0x2cc] sm:$0xff]
    %v1608 = vld [vmem:[#allocation4 + $0x2d4] sm:$0xf]
    %v1609 = vld [vmem:[#allocation4 + $0x2d8] sm:$0xff]
    %v1610 = vld [vmem:[#allocation4 + $0x2e0] sm:$0xff]
    %v1611 = vld [vmem:[#allocation4 + $0x2e8] sm:$0xff]
    %v1612 = vld [vmem:[#allocation4 + $0x2f0] sm:$0xf]
    %v1613 = vld [vmem:[#allocation4 + $0x2f4] sm:$0xff]
    %v1614 = vld [vmem:[#allocation4 + $0x2fc] sm:$0xff]
    %v1615 = vld [vmem:[#allocation4 + $0x304] sm:$0xff]
    %v1616 = vld [vmem:[#allocation4 + $0x30c] sm:$0xf]
    %v1617 = vld [vmem:[#allocation4 + $0x310] sm:$0xff]
    %v1618 = vld [vmem:[#allocation4 + $0x318] sm:$0xff]
    %v1619 = vld [vmem:[#allocation4 + $0x320] sm:$0xff]
    %v1620 = vld [vmem:[#allocation4 + $0x328] sm:$0xf]
    %v1621 = vld [vmem:[#allocation4 + $0x32c] sm:$0xff]
    %v1622 = vld [vmem:[#allocation4 + $0x334] sm:$0xff]
    %v1623 = vld [vmem:[#allocation4 + $0x33c] sm:$0xff]
    %v1624 = vld [vmem:[#allocation4 + $0x344] sm:$0xf]
    %v1625 = vld [vmem:[#allocation4 + $0x348] sm:$0xff]
    %v1626 = vld [vmem:[#allocation4 + $0x350] sm:$0xff]
    %v1627 = vld [vmem:[#allocation4 + $0x358] sm:$0xff]
    %v1628 = vld [vmem:[#allocation4 + $0x360] sm:$0xf]
    %v1629 = vld [vmem:[#allocation4 + $0x364] sm:$0xff]
    %v1630 = vld [vmem:[#allocation4 + $0x36c] sm:$0xff]
    %v1631 = vld [vmem:[#allocation4 + $0x374] sm:$0xff]
    %v1632 = vld [vmem:[#allocation4 + $0x37c] sm:$0xf]
    %v1633 = vld [vmem:[%s13] sm:$0xff]
    %v1635 = vlaneseq
    %v1636 = vshrl.u32 %v1635, 7
    %v1637 = vsub.s32 0, %v1636
    %v1638 = vrot.slane %v1633, %v1637
    %v1639 = vlaneseq
    %v1640 = vshrl.u32 %v1639, 7
    %v1641 = vsub.s32 1, %v1640
    %v1642 = vrot.slane %v1633, %v1641
    %v1643 = vlaneseq
    %v1644 = vshrl.u32 %v1643, 7
    %v1645 = vsub.s32 2, %v1644
    %v1646 = vrot.slane %v1633, %v1645
    %v1647 = vlaneseq
    %v1648 = vshrl.u32 %v1647, 7
    %v1649 = vsub.s32 3, %v1648
    %v1650 = vrot.slane %v1633, %v1649
    %v1651 = vlaneseq
    %v1652 = vshrl.u32 %v1651, 7
    %v1653 = vsub.s32 4, %v1652
    %v1654 = vrot.slane %v1633, %v1653
    %v1655 = vlaneseq
    %v1656 = vshrl.u32 %v1655, 7
    %v1657 = vsub.s32 5, %v1656
    %v1658 = vrot.slane %v1633, %v1657
    %v1659 = vlaneseq
    %v1660 = vshrl.u32 %v1659, 7
    %v1661 = vsub.s32 6, %v1660
    %v1662 = vrot.slane %v1633, %v1661
    %v1798 = vunpack.c.l.b16 %v1505
    %v1799 = vunpack.c.h.b16 %v1505
    %v1800 = vunpack.c.l.b16 %v1506
    %v1801 = vunpack.c.h.b16 %v1506
    %v1802 = vunpack.c.l.b16 %v1507
    %v1803 = vunpack.c.h.b16 %v1507
    %v1804 = vunpack.c.l.b16 %v1508
    %v1805 = vunpack.c.l.b16 %v1509
    %v1806 = vunpack.c.h.b16 %v1509
    %v1807 = vunpack.c.l.b16 %v1510
    %v1808 = vunpack.c.h.b16 %v1510
    %v1809 = vunpack.c.l.b16 %v1511
    %v1810 = vunpack.c.h.b16 %v1511
    %v1811 = vunpack.c.l.b16 %v1512
    %v1812 = vunpack.c.l.b16 %v1513
    %v1813 = vunpack.c.h.b16 %v1513
    %v1814 = vunpack.c.l.b16 %v1514
    %v1815 = vunpack.c.h.b16 %v1514
    %v1816 = vunpack.c.l.b16 %v1515
    %v1817 = vunpack.c.h.b16 %v1515
    %v1818 = vunpack.c.l.b16 %v1516
    %v1819 = vunpack.c.l.b16 %v1517
    %v1820 = vunpack.c.h.b16 %v1517
    %v1821 = vunpack.c.l.b16 %v1518
    %v1822 = vunpack.c.h.b16 %v1518
    %v1823 = vunpack.c.l.b16 %v1519
    %v1824 = vunpack.c.h.b16 %v1519
    %v1825 = vunpack.c.l.b16 %v1520
    %v1826 = vunpack.c.l.b16 %v1521
    %v1827 = vunpack.c.h.b16 %v1521
    %v1828 = vunpack.c.l.b16 %v1522
    %v1829 = vunpack.c.h.b16 %v1522
    %v1830 = vunpack.c.l.b16 %v1523
    %v1831 = vunpack.c.h.b16 %v1523
    %v1832 = vunpack.c.l.b16 %v1524
    %v1833 = vunpack.c.l.b16 %v1525
    %v1834 = vunpack.c.h.b16 %v1525
    %v1835 = vunpack.c.l.b16 %v1526
    %v1836 = vunpack.c.h.b16 %v1526
    %v1837 = vunpack.c.l.b16 %v1527
    %v1838 = vunpack.c.h.b16 %v1527
    %v1839 = vunpack.c.l.b16 %v1528
    %v1840 = vunpack.c.l.b16 %v1529
    %v1841 = vunpack.c.h.b16 %v1529
    %v1842 = vunpack.c.l.b16 %v1530
    %v1843 = vunpack.c.h.b16 %v1530
    %v1844 = vunpack.c.l.b16 %v1531
    %v1845 = vunpack.c.h.b16 %v1531
    %v1846 = vunpack.c.l.b16 %v1532
    %v1847 = vunpack.c.l.b16 %v1533
    %v1848 = vunpack.c.h.b16 %v1533
    %v1849 = vunpack.c.l.b16 %v1534
    %v1850 = vunpack.c.h.b16 %v1534
    %v1851 = vunpack.c.l.b16 %v1535
    %v1852 = vunpack.c.h.b16 %v1535
    %v1853 = vunpack.c.l.b16 %v1536
    %v1854 = vunpack.c.l.b16 %v1537
    %v1855 = vunpack.c.h.b16 %v1537
    %v1856 = vunpack.c.l.b16 %v1538
    %v1857 = vunpack.c.h.b16 %v1538
    %v1858 = vunpack.c.l.b16 %v1539
    %v1859 = vunpack.c.h.b16 %v1539
    %v1860 = vunpack.c.l.b16 %v1540
    %v1861 = vunpack.c.l.b16 %v1541
    %v1862 = vunpack.c.h.b16 %v1541
    %v1863 = vunpack.c.l.b16 %v1542
    %v1864 = vunpack.c.h.b16 %v1542
    %v1865 = vunpack.c.l.b16 %v1543
    %v1866 = vunpack.c.h.b16 %v1543
    %v1867 = vunpack.c.l.b16 %v1544
    %v1868 = vunpack.c.l.b16 %v1545
    %v1869 = vunpack.c.h.b16 %v1545
    %v1870 = vunpack.c.l.b16 %v1546
    %v1871 = vunpack.c.h.b16 %v1546
    %v1872 = vunpack.c.l.b16 %v1547
    %v1873 = vunpack.c.h.b16 %v1547
    %v1874 = vunpack.c.l.b16 %v1548
    %v1875 = vunpack.c.l.b16 %v1549
    %v1876 = vunpack.c.h.b16 %v1549
    %v1877 = vunpack.c.l.b16 %v1550
    %v1878 = vunpack.c.h.b16 %v1550
    %v1879 = vunpack.c.l.b16 %v1551
    %v1880 = vunpack.c.h.b16 %v1551
    %v1881 = vunpack.c.l.b16 %v1552
    %v1882 = vunpack.c.l.b16 %v1553
    %v1883 = vunpack.c.h.b16 %v1553
    %v1884 = vunpack.c.l.b16 %v1554
    %v1885 = vunpack.c.h.b16 %v1554
    %v1886 = vunpack.c.l.b16 %v1555
    %v1887 = vunpack.c.h.b16 %v1555
    %v1888 = vunpack.c.l.b16 %v1556
    %v1889 = vunpack.c.l.b16 %v1557
    %v1890 = vunpack.c.h.b16 %v1557
    %v1891 = vunpack.c.l.b16 %v1558
    %v1892 = vunpack.c.h.b16 %v1558
    %v1893 = vunpack.c.l.b16 %v1559
    %v1894 = vunpack.c.h.b16 %v1559
    %v1895 = vunpack.c.l.b16 %v1560
    %v1896 = vunpack.c.l.b16 %v1561
    %v1897 = vunpack.c.h.b16 %v1561
    %v1898 = vunpack.c.l.b16 %v1562
    %v1899 = vunpack.c.h.b16 %v1562
    %v1900 = vunpack.c.l.b16 %v1563
    %v1901 = vunpack.c.h.b16 %v1563
    %v1902 = vunpack.c.l.b16 %v1564
    %v1903 = vunpack.c.l.b16 %v1565
    %v1904 = vunpack.c.h.b16 %v1565
    %v1905 = vunpack.c.l.b16 %v1566
    %v1906 = vunpack.c.h.b16 %v1566
    %v1907 = vunpack.c.l.b16 %v1567
    %v1908 = vunpack.c.h.b16 %v1567
    %v1909 = vunpack.c.l.b16 %v1568
    %v1910 = vunpack.c.l.b16 %v1569
    %v1911 = vunpack.c.h.b16 %v1569
    %v1912 = vunpack.c.l.b16 %v1570
    %v1913 = vunpack.c.h.b16 %v1570
    %v1914 = vunpack.c.l.b16 %v1571
    %v1915 = vunpack.c.h.b16 %v1571
    %v1916 = vunpack.c.l.b16 %v1572
    %v1917 = vunpack.c.l.b16 %v1573
    %v1918 = vunpack.c.h.b16 %v1573
    %v1919 = vunpack.c.l.b16 %v1574
    %v1920 = vunpack.c.h.b16 %v1574
    %v1921 = vunpack.c.l.b16 %v1575
    %v1922 = vunpack.c.h.b16 %v1575
    %v1923 = vunpack.c.l.b16 %v1576
    %v1924 = vunpack.c.l.b16 %v1577
    %v1925 = vunpack.c.h.b16 %v1577
    %v1926 = vunpack.c.l.b16 %v1578
    %v1927 = vunpack.c.h.b16 %v1578
    %v1928 = vunpack.c.l.b16 %v1579
    %v1929 = vunpack.c.h.b16 %v1579
    %v1930 = vunpack.c.l.b16 %v1580
    %v1931 = vunpack.c.l.b16 %v1581
    %v1932 = vunpack.c.h.b16 %v1581
    %v1933 = vunpack.c.l.b16 %v1582
    %v1934 = vunpack.c.h.b16 %v1582
    %v1935 = vunpack.c.l.b16 %v1583
    %v1936 = vunpack.c.h.b16 %v1583
    %v1937 = vunpack.c.l.b16 %v1584
    %v1938 = vunpack.c.l.b16 %v1585
    %v1939 = vunpack.c.h.b16 %v1585
    %v1940 = vunpack.c.l.b16 %v1586
    %v1941 = vunpack.c.h.b16 %v1586
    %v1942 = vunpack.c.l.b16 %v1587
    %v1943 = vunpack.c.h.b16 %v1587
    %v1944 = vunpack.c.l.b16 %v1588
    %v1945 = vunpack.c.l.b16 %v1589
    %v1946 = vunpack.c.h.b16 %v1589
    %v1947 = vunpack.c.l.b16 %v1590
    %v1948 = vunpack.c.h.b16 %v1590
    %v1949 = vunpack.c.l.b16 %v1591
    %v1950 = vunpack.c.h.b16 %v1591
    %v1951 = vunpack.c.l.b16 %v1592
    %v1952 = vunpack.c.l.b16 %v1593
    %v1953 = vunpack.c.h.b16 %v1593
    %v1954 = vunpack.c.l.b16 %v1594
    %v1955 = vunpack.c.h.b16 %v1594
    %v1956 = vunpack.c.l.b16 %v1595
    %v1957 = vunpack.c.h.b16 %v1595
    %v1958 = vunpack.c.l.b16 %v1596
    %v1959 = vunpack.c.l.b16 %v1597
    %v1960 = vunpack.c.h.b16 %v1597
    %v1961 = vunpack.c.l.b16 %v1598
    %v1962 = vunpack.c.h.b16 %v1598
    %v1963 = vunpack.c.l.b16 %v1599
    %v1964 = vunpack.c.h.b16 %v1599
    %v1965 = vunpack.c.l.b16 %v1600
    %v1966 = vunpack.c.l.b16 %v1601
    %v1967 = vunpack.c.h.b16 %v1601
    %v1968 = vunpack.c.l.b16 %v1602
    %v1969 = vunpack.c.h.b16 %v1602
    %v1970 = vunpack.c.l.b16 %v1603
    %v1971 = vunpack.c.h.b16 %v1603
    %v1972 = vunpack.c.l.b16 %v1604
    %v1973 = vunpack.c.l.b16 %v1605
    %v1974 = vunpack.c.h.b16 %v1605
    %v1975 = vunpack.c.l.b16 %v1606
    %v1976 = vunpack.c.h.b16 %v1606
    %v1977 = vunpack.c.l.b16 %v1607
    %v1978 = vunpack.c.h.b16 %v1607
    %v1979 = vunpack.c.l.b16 %v1608
    %v1980 = vunpack.c.l.b16 %v1609
    %v1981 = vunpack.c.h.b16 %v1609
    %v1982 = vunpack.c.l.b16 %v1610
    %v1983 = vunpack.c.h.b16 %v1610
    %v1984 = vunpack.c.l.b16 %v1611
    %v1985 = vunpack.c.h.b16 %v1611
    %v1986 = vunpack.c.l.b16 %v1612
    %v1987 = vunpack.c.l.b16 %v1613
    %v1988 = vunpack.c.h.b16 %v1613
    %v1989 = vunpack.c.l.b16 %v1614
    %v1990 = vunpack.c.h.b16 %v1614
    %v1991 = vunpack.c.l.b16 %v1615
    %v1992 = vunpack.c.h.b16 %v1615
    %v1993 = vunpack.c.l.b16 %v1616
    %v1994 = vunpack.c.l.b16 %v1617
    %v1995 = vunpack.c.h.b16 %v1617
    %v1996 = vunpack.c.l.b16 %v1618
    %v1997 = vunpack.c.h.b16 %v1618
    %v1998 = vunpack.c.l.b16 %v1619
    %v1999 = vunpack.c.h.b16 %v1619
    %v2000 = vunpack.c.l.b16 %v1620
    %v2001 = vunpack.c.l.b16 %v1621
    %v2002 = vunpack.c.h.b16 %v1621
    %v2003 = vunpack.c.l.b16 %v1622
    %v2004 = vunpack.c.h.b16 %v1622
    %v2005 = vunpack.c.l.b16 %v1623
    %v2006 = vunpack.c.h.b16 %v1623
    %v2007 = vunpack.c.l.b16 %v1624
    %v2008 = vunpack.c.l.b16 %v1625
    %v2009 = vunpack.c.h.b16 %v1625
    %v2010 = vunpack.c.l.b16 %v1626
    %v2011 = vunpack.c.h.b16 %v1626
    %v2012 = vunpack.c.l.b16 %v1627
    %v2013 = vunpack.c.h.b16 %v1627
    %v2014 = vunpack.c.l.b16 %v1628
    %v2015 = vunpack.c.l.b16 %v1629
    %v2016 = vunpack.c.h.b16 %v1629
    %v2017 = vunpack.c.l.b16 %v1630
    %v2018 = vunpack.c.h.b16 %v1630
    %v2019 = vunpack.c.l.b16 %v1631
    %v2020 = vunpack.c.h.b16 %v1631
    %v2021 = vunpack.c.l.b16 %v1632
    %v2022 = vpack.c.b16 %v1805, %v1798
    %v2023 = vpack.c.b16 %v1806, %v1799
    %v2024 = vpack.c.b16 %v1807, %v1800
    %v2025 = vpack.c.b16 %v1808, %v1801
    %v2026 = vpack.c.b16 %v1809, %v1802
    %v2027 = vpack.c.b16 %v1810, %v1803
    %v2028 = vpack.c.b16 %v1811, %v1804
    %v2029 = vpack.c.b16 %v1819, %v1812
    %v2030 = vpack.c.b16 %v1820, %v1813
    %v2031 = vpack.c.b16 %v1821, %v1814
    %v2032 = vpack.c.b16 %v1822, %v1815
    %v2033 = vpack.c.b16 %v1823, %v1816
    %v2034 = vpack.c.b16 %v1824, %v1817
    %v2035 = vpack.c.b16 %v1825, %v1818
    %v2036 = vpack.c.b16 %v1833, %v1826
    %v2037 = vpack.c.b16 %v1834, %v1827
    %v2038 = vpack.c.b16 %v1835, %v1828
    %v2039 = vpack.c.b16 %v1836, %v1829
    %v2040 = vpack.c.b16 %v1837, %v1830
    %v2041 = vpack.c.b16 %v1838, %v1831
    %v2042 = vpack.c.b16 %v1839, %v1832
    %v2043 = vpack.c.b16 %v1847, %v1840
    %v2044 = vpack.c.b16 %v1848, %v1841
    %v2045 = vpack.c.b16 %v1849, %v1842
    %v2046 = vpack.c.b16 %v1850, %v1843
    %v2047 = vpack.c.b16 %v1851, %v1844
    %v2048 = vpack.c.b16 %v1852, %v1845
    %v2049 = vpack.c.b16 %v1853, %v1846
    %v2050 = vpack.c.b16 %v1861, %v1854
    %v2051 = vpack.c.b16 %v1862, %v1855
    %v2052 = vpack.c.b16 %v1863, %v1856
    %v2053 = vpack.c.b16 %v1864, %v1857
    %v2054 = vpack.c.b16 %v1865, %v1858
    %v2055 = vpack.c.b16 %v1866, %v1859
    %v2056 = vpack.c.b16 %v1867, %v1860
    %v2057 = vpack.c.b16 %v1875, %v1868
    %v2058 = vpack.c.b16 %v1876, %v1869
    %v2059 = vpack.c.b16 %v1877, %v1870
    %v2060 = vpack.c.b16 %v1878, %v1871
    %v2061 = vpack.c.b16 %v1879, %v1872
    %v2062 = vpack.c.b16 %v1880, %v1873
    %v2063 = vpack.c.b16 %v1881, %v1874
    %v2064 = vpack.c.b16 %v1889, %v1882
    %v2065 = vpack.c.b16 %v1890, %v1883
    %v2066 = vpack.c.b16 %v1891, %v1884
    %v2067 = vpack.c.b16 %v1892, %v1885
    %v2068 = vpack.c.b16 %v1893, %v1886
    %v2069 = vpack.c.b16 %v1894, %v1887
    %v2070 = vpack.c.b16 %v1895, %v1888
    %v2071 = vpack.c.b16 %v1903, %v1896
    %v2072 = vpack.c.b16 %v1904, %v1897
    %v2073 = vpack.c.b16 %v1905, %v1898
    %v2074 = vpack.c.b16 %v1906, %v1899
    %v2075 = vpack.c.b16 %v1907, %v1900
    %v2076 = vpack.c.b16 %v1908, %v1901
    %v2077 = vpack.c.b16 %v1909, %v1902
    %v2078 = vpack.c.b16 %v1917, %v1910
    %v2079 = vpack.c.b16 %v1918, %v1911
    %v2080 = vpack.c.b16 %v1919, %v1912
    %v2081 = vpack.c.b16 %v1920, %v1913
    %v2082 = vpack.c.b16 %v1921, %v1914
    %v2083 = vpack.c.b16 %v1922, %v1915
    %v2084 = vpack.c.b16 %v1923, %v1916
    %v2085 = vpack.c.b16 %v1931, %v1924
    %v2086 = vpack.c.b16 %v1932, %v1925
    %v2087 = vpack.c.b16 %v1933, %v1926
    %v2088 = vpack.c.b16 %v1934, %v1927
    %v2089 = vpack.c.b16 %v1935, %v1928
    %v2090 = vpack.c.b16 %v1936, %v1929
    %v2091 = vpack.c.b16 %v1937, %v1930
    %v2092 = vpack.c.b16 %v1945, %v1938
    %v2093 = vpack.c.b16 %v1946, %v1939
    %v2094 = vpack.c.b16 %v1947, %v1940
    %v2095 = vpack.c.b16 %v1948, %v1941
    %v2096 = vpack.c.b16 %v1949, %v1942
    %v2097 = vpack.c.b16 %v1950, %v1943
    %v2098 = vpack.c.b16 %v1951, %v1944
    %v2099 = vpack.c.b16 %v1959, %v1952
    %v2100 = vpack.c.b16 %v1960, %v1953
    %v2101 = vpack.c.b16 %v1961, %v1954
    %v2102 = vpack.c.b16 %v1962, %v1955
    %v2103 = vpack.c.b16 %v1963, %v1956
    %v2104 = vpack.c.b16 %v1964, %v1957
    %v2105 = vpack.c.b16 %v1965, %v1958
    %v2106 = vpack.c.b16 %v1973, %v1966
    %v2107 = vpack.c.b16 %v1974, %v1967
    %v2108 = vpack.c.b16 %v1975, %v1968
    %v2109 = vpack.c.b16 %v1976, %v1969
    %v2110 = vpack.c.b16 %v1977, %v1970
    %v2111 = vpack.c.b16 %v1978, %v1971
    %v2112 = vpack.c.b16 %v1979, %v1972
    %v2113 = vpack.c.b16 %v1987, %v1980
    %v2114 = vpack.c.b16 %v1988, %v1981
    %v2115 = vpack.c.b16 %v1989, %v1982
    %v2116 = vpack.c.b16 %v1990, %v1983
    %v2117 = vpack.c.b16 %v1991, %v1984
    %v2118 = vpack.c.b16 %v1992, %v1985
    %v2119 = vpack.c.b16 %v1993, %v1986
    %v2120 = vpack.c.b16 %v2001, %v1994
    %v2121 = vpack.c.b16 %v2002, %v1995
    %v2122 = vpack.c.b16 %v2003, %v1996
    %v2123 = vpack.c.b16 %v2004, %v1997
    %v2124 = vpack.c.b16 %v2005, %v1998
    %v2125 = vpack.c.b16 %v2006, %v1999
    %v2126 = vpack.c.b16 %v2007, %v2000
    %v2127 = vpack.c.b16 %v2015, %v2008
    %v2128 = vpack.c.b16 %v2016, %v2009
    %v2129 = vpack.c.b16 %v2017, %v2010
    %v2130 = vpack.c.b16 %v2018, %v2011
    %v2131 = vpack.c.b16 %v2019, %v2012
    %v2132 = vpack.c.b16 %v2020, %v2013
    %v2133 = vpack.c.b16 %v2021, %v2014
    %2246 = vmatprep.subr.bf16.mxu0 %v2072
    %2247 = vmatpush1.bf16.msra.mxu0 %v2071
    %2248 = vmatprep.subr.bf16.mxu0 %v2065
    %2249 = vmatpush1.bf16.msra.mxu0 %v2064
    %2250 = vmatprep.subr.bf16.mxu0 %v2058
    %2251 = vmatpush1.bf16.msra.mxu0 %v2057
    %2252 = vmatprep.subr.bf16.mxu0 %v2051
    %2253 = vmatpush1.bf16.msra.mxu0 %v2050
    %2254 = vmatprep.subr.bf16.mxu0 %v2044
    %2255 = vmatpush1.bf16.msra.mxu0 %v2043
    %2256 = vmatprep.subr.bf16.mxu0 %v2037
    %2257 = vmatpush1.bf16.msra.mxu0 %v2036
    %2258 = vmatprep.subr.bf16.mxu0 %v2030
    %2259 = vmatpush1.bf16.msra.mxu0 %v2029
    %2260 = vmatprep.subr.bf16.mxu0 %v2023
    %2261 = vmatpush1.bf16.msra.mxu0 %v2022
    %2262 = vmatprep.subr.bf16.mxu0 %v2128
    %2263 = vmatpush2.bf16.msra.mxu0 %v2127
    %2264 = vmatprep.subr.bf16.mxu0 %v2121
    %2265 = vmatpush2.bf16.msra.mxu0 %v2120
    %2266 = vmatprep.subr.bf16.mxu0 %v2114
    %2267 = vmatpush2.bf16.msra.mxu0 %v2113
    %2268 = vmatprep.subr.bf16.mxu0 %v2107
    %2269 = vmatpush2.bf16.msra.mxu0 %v2106
    %2270 = vmatprep.subr.bf16.mxu0 %v2100
    %2271 = vmatpush2.bf16.msra.mxu0 %v2099
    %2272 = vmatprep.subr.bf16.mxu0 %v2093
    %2273 = vmatpush2.bf16.msra.mxu0 %v2092
    %2274 = vmatprep.subr.bf16.mxu0 %v2086
    %2275 = vmatpush2.bf16.msra.mxu0 %v2085
    %2276 = vmatprep.subr.bf16.mxu0 %v2079
    %2277 = vmatpush2.bf16.msra.mxu0 %v2078
    %2278 = vmatprep.mubr.bf16.mxu0 %v1504
    %2279 = vmatmul.mubr.bf16.gmra.mxu0 %v1503
    %v2280 = vpop.f32.mrf.mxu0
    %v2281 = vadd.f32 %v1638, %v2280
    %v2282 = vpop.f32.mrf.mxu0
    %v2283 = vadd.f32 %v1642, %v2282
    %v2284 = vpop.f32.mrf.mxu0
    %v2285 = vadd.f32 %v1638, %v2284
    %v2286 = vpop.f32.mrf.mxu0
    %v2287 = vadd.f32 %v1642, %v2286
    %2288 = vdwg.mxu0
    %2289 = vmatprep.subr.bf16.mxu0 %v2074
    %2290 = vmatpush1.bf16.msra.mxu0 %v2073
    %2291 = vmatprep.subr.bf16.mxu0 %v2067
    %2292 = vmatpush1.bf16.msra.mxu0 %v2066
    %2293 = vmatprep.subr.bf16.mxu0 %v2060
    %2294 = vmatpush1.bf16.msra.mxu0 %v2059
    %2295 = vmatprep.subr.bf16.mxu0 %v2053
    %2296 = vmatpush1.bf16.msra.mxu0 %v2052
    %2297 = vmatprep.subr.bf16.mxu0 %v2046
    %2298 = vmatpush1.bf16.msra.mxu0 %v2045
    %2299 = vmatprep.subr.bf16.mxu0 %v2039
    %2300 = vmatpush1.bf16.msra.mxu0 %v2038
    %2301 = vmatprep.subr.bf16.mxu0 %v2032
    %2302 = vmatpush1.bf16.msra.mxu0 %v2031
    %2303 = vmatprep.subr.bf16.mxu0 %v2025
    %2304 = vmatpush1.bf16.msra.mxu0 %v2024
    %2305 = vmatprep.subr.bf16.mxu0 %v2130
    %2306 = vmatpush2.bf16.msra.mxu0 %v2129
    %2307 = vmatprep.subr.bf16.mxu0 %v2123
    %2308 = vmatpush2.bf16.msra.mxu0 %v2122
    %2309 = vmatprep.subr.bf16.mxu0 %v2116
    %2310 = vmatpush2.bf16.msra.mxu0 %v2115
    %2311 = vmatprep.subr.bf16.mxu0 %v2109
    %2312 = vmatpush2.bf16.msra.mxu0 %v2108
    %2313 = vmatprep.subr.bf16.mxu0 %v2102
    %2314 = vmatpush2.bf16.msra.mxu0 %v2101
    %2315 = vmatprep.subr.bf16.mxu0 %v2095
    %2316 = vmatpush2.bf16.msra.mxu0 %v2094
    %2317 = vmatprep.subr.bf16.mxu0 %v2088
    %2318 = vmatpush2.bf16.msra.mxu0 %v2087
    %2319 = vmatprep.subr.bf16.mxu0 %v2081
    %2320 = vmatpush2.bf16.msra.mxu0 %v2080
    %2321 = vmatprep.mubr.bf16.mxu0 %v1504
    %2322 = vmatmul.mubr.bf16.gmra.mxu0 %v1503
    %v2323 = vpop.f32.mrf.mxu0
    %v2324 = vadd.f32 %v1646, %v2323
    %v2325 = vpop.f32.mrf.mxu0
    %v2326 = vadd.f32 %v1650, %v2325
    %v2327 = vpop.f32.mrf.mxu0
    %v2328 = vadd.f32 %v1646, %v2327
    %v2329 = vpop.f32.mrf.mxu0
    %v2330 = vadd.f32 %v1650, %v2329
    %2331 = vdwg.mxu0
    %2332 = vmatprep.subr.bf16.mxu0 %v2076
    %2333 = vmatpush1.bf16.msra.mxu0 %v2075
    %2334 = vmatprep.subr.bf16.mxu0 %v2069
    %2335 = vmatpush1.bf16.msra.mxu0 %v2068
    %2336 = vmatprep.subr.bf16.mxu0 %v2062
    %2337 = vmatpush1.bf16.msra.mxu0 %v2061
    %2338 = vmatprep.subr.bf16.mxu0 %v2055
    %2339 = vmatpush1.bf16.msra.mxu0 %v2054
    %2340 = vmatprep.subr.bf16.mxu0 %v2048
    %2341 = vmatpush1.bf16.msra.mxu0 %v2047
    %2342 = vmatprep.subr.bf16.mxu0 %v2041
    %2343 = vmatpush1.bf16.msra.mxu0 %v2040
    %2344 = vmatprep.subr.bf16.mxu0 %v2034
    %2345 = vmatpush1.bf16.msra.mxu0 %v2033
    %2346 = vmatprep.subr.bf16.mxu0 %v2027
    %2347 = vmatpush1.bf16.msra.mxu0 %v2026
    %2348 = vmatprep.subr.bf16.mxu0 %v2132
    %2349 = vmatpush2.bf16.msra.mxu0 %v2131
    %2350 = vmatprep.subr.bf16.mxu0 %v2125
    %2351 = vmatpush2.bf16.msra.mxu0 %v2124
    %2352 = vmatprep.subr.bf16.mxu0 %v2118
    %2353 = vmatpush2.bf16.msra.mxu0 %v2117
    %2354 = vmatprep.subr.bf16.mxu0 %v2111
    %2355 = vmatpush2.bf16.msra.mxu0 %v2110
    %2356 = vmatprep.subr.bf16.mxu0 %v2104
    %2357 = vmatpush2.bf16.msra.mxu0 %v2103
    %2358 = vmatprep.subr.bf16.mxu0 %v2097
    %2359 = vmatpush2.bf16.msra.mxu0 %v2096
    %2360 = vmatprep.subr.bf16.mxu0 %v2090
    %2361 = vmatpush2.bf16.msra.mxu0 %v2089
    %2362 = vmatprep.subr.bf16.mxu0 %v2083
    %2363 = vmatpush2.bf16.msra.mxu0 %v2082
    %2364 = vmatprep.mubr.bf16.mxu0 %v1504
    %2365 = vmatmul.mubr.bf16.gmra.mxu0 %v1503
    %v2366 = vpop.f32.mrf.mxu0
    %v2367 = vadd.f32 %v1654, %v2366
    %v2368 = vpop.f32.mrf.mxu0
    %v2369 = vadd.f32 %v1658, %v2368
    %v2370 = vpop.f32.mrf.mxu0
    %v2371 = vadd.f32 %v1654, %v2370
    %v2372 = vpop.f32.mrf.mxu0
    %v2373 = vadd.f32 %v1658, %v2372
    %2374 = vdwg.mxu0
    %2375 = vmatprep.subr.bf16.mxu0 0
    %2376 = vmatpush1.bf16.msra.mxu0 %v2077
    %2377 = vmatprep.subr.bf16.mxu0 0
    %2378 = vmatpush1.bf16.msra.mxu0 %v2070
    %2379 = vmatprep.subr.bf16.mxu0 0
    %2380 = vmatpush1.bf16.msra.mxu0 %v2063
    %2381 = vmatprep.subr.bf16.mxu0 0
    %2382 = vmatpush1.bf16.msra.mxu0 %v2056
    %2383 = vmatprep.subr.bf16.mxu0 0
    %2384 = vmatpush1.bf16.msra.mxu0 %v2049
    %2385 = vmatprep.subr.bf16.mxu0 0
    %2386 = vmatpush1.bf16.msra.mxu0 %v2042
    %2387 = vmatprep.subr.bf16.mxu0 0
    %2388 = vmatpush1.bf16.msra.mxu0 %v2035
    %2389 = vmatprep.subr.bf16.mxu0 0
    %2390 = vmatpush1.bf16.msra.mxu0 %v2028
    %2391 = vmatprep.subr.bf16.mxu0 0
    %2392 = vmatpush2.bf16.msra.mxu0 %v2133
    %2393 = vmatprep.subr.bf16.mxu0 0
    %2394 = vmatpush2.bf16.msra.mxu0 %v2126
    %2395 = vmatprep.subr.bf16.mxu0 0
    %2396 = vmatpush2.bf16.msra.mxu0 %v2119
    %2397 = vmatprep.subr.bf16.mxu0 0
    %2398 = vmatpush2.bf16.msra.mxu0 %v2112
    %2399 = vmatprep.subr.bf16.mxu0 0
    %2400 = vmatpush2.bf16.msra.mxu0 %v2105
    %2401 = vmatprep.subr.bf16.mxu0 0
    %2402 = vmatpush2.bf16.msra.mxu0 %v2098
    %2403 = vmatprep.subr.bf16.mxu0 0
    %2404 = vmatpush2.bf16.msra.mxu0 %v2091
    %2405 = vmatprep.subr.bf16.mxu0 0
    %2406 = vmatpush2.bf16.msra.mxu0 %v2084
    %2407 = vmatprep.mubr.bf16.mxu0 %v1504
    %2408 = vmatmul.mubr.bf16.gmra.mxu0 %v1503
    %v2409 = vpop.f32.mrf.mxu0
    %v2410 = vadd.f32 %v1662, %v2409
    %v2411 = vpop.f32.mrf.mxu0
    %v2412 = vpop.f32.mrf.mxu0
    %v2413 = vadd.f32 %v1662, %v2412
    %v2414 = vpop.f32.mrf.mxu0
    %2415 = vdwg.mxu0
    %v2416 = vxor.u32 %v2281, 2147483648
    %v2417 = vxor.u32 %v2283, 2147483648
    %v2418 = vxor.u32 %v2324, 2147483648
    %v2419 = vxor.u32 %v2326, 2147483648
    %v2420 = vxor.u32 %v2367, 2147483648
    %v2421 = vxor.u32 %v2369, 2147483648
    %v2422 = vxor.u32 %v2410, 2147483648
    %v2423 = vxor.u32 %v2285, 2147483648
    %v2424 = vxor.u32 %v2287, 2147483648
    %v2425 = vxor.u32 %v2328, 2147483648
    %v2426 = vxor.u32 %v2330, 2147483648
    %v2427 = vxor.u32 %v2371, 2147483648
    %v2428 = vxor.u32 %v2373, 2147483648
    %v2429 = vxor.u32 %v2413, 2147483648
    %v2430 = vmul.f32 %v2416, 1.442695
    %v2431 = vpow.pop %v2430
    %v2432 = vmul.f32 %v2417, 1.442695
    %v2433 = vpow.pop %v2432
    %v2434 = vmul.f32 %v2418, 1.442695
    %v2435 = vpow.pop %v2434
    %v2436 = vmul.f32 %v2419, 1.442695
    %v2437 = vpow.pop %v2436
    %v2438 = vmul.f32 %v2420, 1.442695
    %v2439 = vpow.pop %v2438
    %v2440 = vmul.f32 %v2421, 1.442695
    %v2441 = vpow.pop %v2440
    %v2442 = vmul.f32 %v2422, 1.442695
    %v2443 = vpow.pop %v2442
    %v2444 = vmul.f32 %v2423, 1.442695
    %v2445 = vpow.pop %v2444
    %v2446 = vmul.f32 %v2424, 1.442695
    %v2447 = vpow.pop %v2446
    %v2448 = vmul.f32 %v2425, 1.442695
    %v2449 = vpow.pop %v2448
    %v2450 = vmul.f32 %v2426, 1.442695
    %v2451 = vpow.pop %v2450
    %v2452 = vmul.f32 %v2427, 1.442695
    %v2453 = vpow.pop %v2452
    %v2454 = vmul.f32 %v2428, 1.442695
    %v2455 = vpow.pop %v2454
    %v2456 = vmul.f32 %v2429, 1.442695
    %v2457 = vpow.pop %v2456
    %v2458 = vadd.f32 %v2431, 1.0
    %v2459 = vadd.f32 %v2433, 1.0
    %v2460 = vadd.f32 %v2435, 1.0
    %v2461 = vadd.f32 %v2437, 1.0
    %v2462 = vadd.f32 %v2439, 1.0
    %v2463 = vadd.f32 %v2441, 1.0
    %v2464 = vadd.f32 %v2443, 1.0
    %v2465 = vadd.f32 %v2445, 1.0
    %v2466 = vadd.f32 %v2447, 1.0
    %v2467 = vadd.f32 %v2449, 1.0
    %v2468 = vadd.f32 %v2451, 1.0
    %v2469 = vadd.f32 %v2453, 1.0
    %v2470 = vadd.f32 %v2455, 1.0
    %v2471 = vadd.f32 %v2457, 1.0
    %v2472 = vrcp.pop %v2458
    %v2473 = vmul.f32 1.0, %v2472
    %v2474 = vrcp.pop %v2459
    %v2475 = vmul.f32 1.0, %v2474
    %v2476 = vrcp.pop %v2460
    %v2477 = vmul.f32 1.0, %v2476
    %v2478 = vrcp.pop %v2461
    %v2479 = vmul.f32 1.0, %v2478
    %v2480 = vrcp.pop %v2462
    %v2481 = vmul.f32 1.0, %v2480
    %v2482 = vrcp.pop %v2463
    %v2483 = vmul.f32 1.0, %v2482
    %v2484 = vrcp.pop %v2464
    %v2485 = vmul.f32 1.0, %v2484
    %v2486 = vrcp.pop %v2465
    %v2487 = vmul.f32 1.0, %v2486
    %v2488 = vrcp.pop %v2466
    %v2489 = vmul.f32 1.0, %v2488
    %v2490 = vrcp.pop %v2467
    %v2491 = vmul.f32 1.0, %v2490
    %v2492 = vrcp.pop %v2468
    %v2493 = vmul.f32 1.0, %v2492
    %v2494 = vrcp.pop %v2469
    %v2495 = vmul.f32 1.0, %v2494
    %v2496 = vrcp.pop %v2470
    %v2497 = vmul.f32 1.0, %v2496
    %v2498 = vrcp.pop %v2471
    %v2499 = vmul.f32 1.0, %v2498
    %2500 = vst [vmem:[%s14] sm:$0xff] %v2473
    %2501 = vst [vmem:[%s14 + $0x8] sm:$0xff] %v2475
    %2502 = vst [vmem:[%s14 + $0x10] sm:$0xff] %v2477
    %2503 = vst [vmem:[%s14 + $0x18] sm:$0xff] %v2479
    %2504 = vst [vmem:[%s14 + $0x20] sm:$0xff] %v2481
    %2505 = vst [vmem:[%s14 + $0x28] sm:$0xff] %v2483
    %2506 = vst [vmem:[%s14 + $0x30] sm:$0xff] %v2485
    %2507 = vst [vmem:[%s14 + $0x38] sm:$0xff] %v2487
    %2508 = vst [vmem:[%s14 + $0x40] sm:$0xff] %v2489
    %2509 = vst [vmem:[%s14 + $0x48] sm:$0xff] %v2491
    %2510 = vst [vmem:[%s14 + $0x50] sm:$0xff] %v2493
    %2511 = vst [vmem:[%s14 + $0x58] sm:$0xff] %v2495
    %2512 = vst [vmem:[%s14 + $0x60] sm:$0xff] %v2497
    %2513 = vst [vmem:[%s14 + $0x68] sm:$0xff] %v2499
    %2514 = vst [vmem:[%s15] sm:$0xff] %v1269
    %2515 = vst [vmem:[%s15 + $0x8] sm:$0xff] %v1272
    // Predicated region
    $region66: #{vae_forward.1} parent=1 // pred_check
      _
    $region67: #{vae_forward.1} parent=1 // pred_check_branch
      %2517 = sbr.rel (0) target = $region69
    $region68: #{vae_forward.1} parent=1 // pred_region
      _
    $region69: #{vae_forward.1} parent=1 // pred_fallthru
      _
    // Predicated region
    $region70: #{vae_forward.1} parent=1 // pred_check
      _
    $region71: #{vae_forward.1} parent=1 // pred_check_branch
      %2519 = sbr.rel (0) target = $region73
    $region72: #{vae_forward.1} parent=1 // pred_region
      _
    $region73: #{vae_forward.1} parent=1 // pred_fallthru
      _
    // Predicated region
    $region74: #{vae_forward.1} parent=1 // pred_check
      _
    $region75: #{vae_forward.1} parent=1 // pred_check_branch
      %2521 = sbr.rel (0) target = $region77
    $region76: #{vae_forward.1} parent=1 // pred_region
      _
    $region77: #{vae_forward.1} parent=1 // pred_fallthru
      _
    // Predicated region
    $region78: #{vae_forward.1} parent=1 // pred_check
      _
    $region79: #{vae_forward.1} parent=1 // pred_check_branch
      %2523 = sbr.rel (0) target = $region81
    $region80: #{vae_forward.1} parent=1 // pred_region
      _
    $region81: #{vae_forward.1} parent=1 // pred_fallthru
      _
    %2524 = vsyncpa [#allocation3], 1
    %2525 = vsyncpa [#allocation5], 1

</llo_original>
